<compile_context>
chip_gen: v7x
topology: tpu7x:2x2x1
jax: 0.10.0
libtpu: 0.0.40
codegen_flags: <defaults>
</compile_context>

<pallas_src>
import jax
import jax.numpy as jnp
from jax.experimental import pallas as pl
from jax.experimental.pallas import tpu as pltpu


def afm_kernel(emb_ref, fv_ref, fo_ref, watt_ref, pmask_ref, wout_ref,
               attn_b_ref, attn_h_ref, bias_ref, out_ref):
    F, E, TB = emb_ref.shape           # batch tile TB on the lane axis
    A = watt_ref.shape[0]

    fv = fv_ref[...]                                   # (F, 1, TB)
    emb = emb_ref[...] * fv                            # (F, E, TB)
    y_first = fo_ref[...] * fv                         # (F, 1, TB)

    # All F*F pairwise element-wise products at once (no python pair loop).
    prod = emb[:, None, :, :] * emb[None, :, :, :]     # (F, F, E, TB)

    # Attention MLP, unrolled over the (small, static) attention dim A.
    # energy_a = relu(sum_e prod[..,e,:] * W[e,a] + b[a]);  logits += energy_a * h[a]
    # Pure VPU/XLU work; avoids degenerate MXU matmuls.
    logits = jnp.zeros((F, F, 1, TB), jnp.float32)
    for a in range(A):
        w_a = watt_ref[a]                              # (E, 1) -> lane broadcast
        e_a = jnp.sum(prod * w_a, axis=2, keepdims=True) + attn_b_ref[a]
        logits = logits + jnp.maximum(e_a, 0.0) * attn_h_ref[a]

    # Softmax over the i<j pairs only (additive mask removes diag/lower tri).
    logits = logits + pmask_ref[...]                   # (F, F, 1, 1) broadcast
    m = jnp.max(logits, axis=(0, 1), keepdims=True)    # (1, 1, 1, TB)
    e = jnp.exp(logits - m)
    denom = jnp.sum(e, axis=(0, 1), keepdims=True)
    attn = e * pl.reciprocal(denom, approx=True)       # (F, F, 1, TB)

    # Attention-weighted sum of pairwise products -> (E, TB)
    y2 = jnp.sum(prod * attn, axis=(0, 1))
    # Final linear projection (no bias) -> (1, TB), VPU reduction not matmul.
    y_second = jnp.sum(y2 * wout_ref[...], axis=0, keepdims=True)

    out = y_first + (y_second + bias_ref[0])[None, :, :]   # (F, 1, TB)
    out_ref[...] = out.astype(out_ref.dtype)


def afm_forward(feature_index, feature_value, params, *, block_b=512):
    table = params["feature_embedding"]                       # (N, E)
    fo_table = params["fm_first_order"]                       # (N, 1)
    attn_w = params["attn_w"].astype(jnp.float32)             # (E, A)
    attn_b = params["attn_b"].reshape(-1).astype(jnp.float32)     # (A,)
    attn_h = params["attn_out_w"].reshape(-1).astype(jnp.float32) # (A,)
    out_w = params["out_w"].astype(jnp.float32)               # (E, 1)
    bias = params["bias"].reshape(-1).astype(jnp.float32)     # (1,)

    B, F = feature_index.shape
    E = table.shape[1]
    A = attn_w.shape[1]

    # Glue (plain JAX): embedding gathers + layout flip so batch -> lane axis.
    # TODO(synk): on v6e/v7x feed emb_t/fv_t/fo_t as bf16 and upcast in-kernel
    # to halve the dominant HBM traffic (kept f32 here for v5e and to match
    # the f32 reference bit-for-bit within tolerance).
    emb = table[feature_index]                                # (B, F, E)
    fo = fo_table[feature_index][..., 0]                      # (B, F)
    emb_t = jnp.transpose(emb, (1, 2, 0)).astype(jnp.float32)     # (F, E, B)
    fv_t = feature_value.astype(jnp.float32).T[:, None, :]        # (F, 1, B)
    fo_t = fo.astype(jnp.float32).T[:, None, :]                   # (F, 1, B)

    # Batch tile: lane-dense multiple of 128 when the batch allows it.
    # (v7x has half the VMEM of v6e -> keep the default tile modest; sweep.)
    if B >= 128:
        tb = max(128, (min(block_b, 1024) // 128) * 128)
        bp = pl.cdiv(B, tb) * tb
    else:
        tb, bp = B, B
    if bp != B:
        pad = ((0, 0), (0, 0), (0, bp - B))
        emb_t = jnp.pad(emb_t, pad)
        fv_t = jnp.pad(fv_t, pad)
        fo_t = jnp.pad(fo_t, pad)

    # Additive mask selecting the upper-triangle (i < j) "pairs".
    ii = jnp.arange(F)[:, None]
    jj = jnp.arange(F)[None, :]
    pmask = jnp.where(ii < jj, 0.0, -1e30).astype(jnp.float32)[:, :, None, None]

    watt_rows = attn_w.T[:, :, None]                          # (A, E, 1)

    smem = pl.BlockSpec(memory_space=pltpu.MemorySpace.SMEM)
    out = pl.pallas_call(
        afm_kernel,
        out_shape=jax.ShapeDtypeStruct((F, 1, bp), jnp.float32),
        grid=(bp // tb,),
        in_specs=[
            pl.BlockSpec((F, E, tb), lambda i: (0, 0, i)),        # embeddings
            pl.BlockSpec((F, 1, tb), lambda i: (0, 0, i)),        # feature_value
            pl.BlockSpec((F, 1, tb), lambda i: (0, 0, i)),        # first-order w
            pl.BlockSpec((A, E, 1), lambda i: (0, 0, 0)),         # attn W (rows)
            pl.BlockSpec((F, F, 1, 1), lambda i: (0, 0, 0, 0)),   # pair mask
            pl.BlockSpec((E, 1), lambda i: (0, 0)),               # output-layer w
            smem,                                                 # attn bias (A,)
            smem,                                                 # attn out w (A,)
            smem,                                                 # global bias (1,)
        ],
        out_specs=pl.BlockSpec((F, 1, tb), lambda i: (0, 0, i)),
        compiler_params=pltpu.CompilerParams(
            dimension_semantics=("parallel",)),
    )(emb_t, fv_t, fo_t, watt_rows, pmask, out_w, attn_b, attn_h, bias)

    return out[:, 0, :B].T                                    # (B, F)


def afm_reference(feature_index, feature_value, params):
    """Pure-JAX reference reproducing the PyTorch forward exactly."""
    emb = params["feature_embedding"][feature_index]          # (B, F, E)
    fv = feature_value[..., None]                             # (B, F, 1)
    emb = emb * fv
    fo = params["fm_first_order"][feature_index]              # (B, F, 1)
    y_first = jnp.sum(fo * fv, axis=2)                        # (B, F)
    F = feature_index.shape[1]
    pairs = []
    for i in range(F - 1):
        for j in range(i + 1, F):
            pairs.append(emb[:, i] * emb[:, j])
    ewp = jnp.stack(pairs, axis=1)                            # (B, P, E)
    energy = jax.nn.relu(ewp @ params["attn_w"] + params["attn_b"].reshape(-1))
    logits = (energy @ params["attn_out_w"])[..., 0]          # (B, P)
    attn = jax.nn.softmax(logits, axis=1)                     # legacy dim=1
    y2 = jnp.sum(ewp * attn[..., None], axis=1)               # (B, E)
    y_second = y2 @ params["out_w"]                           # (B, 1)
    return y_first + y_second + params["bias"][0]


if __name__ == "__main__":
    B, F, E, A = 4, 4, 16, 8
    NUM_FEATURES = 32

    key = jax.random.PRNGKey(0)
    keys = jax.random.split(key, 8)

    params = {
        "feature_embedding": jax.random.normal(keys[0], (NUM_FEATURES, E), jnp.float32),
        "fm_first_order":    jax.random.normal(keys[1], (NUM_FEATURES, 1), jnp.float32),
        "attn_w":            jax.random.normal(keys[2], (E, A), jnp.float32) * 0.2,
        "attn_b":            jax.random.normal(keys[3], (1, A), jnp.float32) * 0.1,
        "attn_out_w":        jax.random.normal(keys[4], (A, 1), jnp.float32) * 0.2,
        "out_w":             jax.random.normal(keys[5], (E, 1), jnp.float32) * 0.2,
        "bias":              jax.random.uniform(keys[6], (1,), jnp.float32),
    }

    feature_index = jax.random.randint(keys[7], (B, F), 0, NUM_FEATURES, jnp.int32)
    feature_value = jax.random.uniform(jax.random.PRNGKey(1), (B, F), jnp.float32)

    out = afm_forward(feature_index, feature_value, params)
    out = jax.block_until_ready(out)

    ref = afm_reference(feature_index, feature_value, params)
    assert out.shape == (B, F), out.shape
    # slightly loose tolerance because of the EUP approximate reciprocal
    assert jnp.allclose(out, ref, atol=2e-3, rtol=2e-3), (out, ref)

    print("KERNEL_OK")
</pallas_src>

<mosaic_0001>
module attributes {stable_mosaic.version = 11 : i64} {
  func.func @afm_kernel(%arg0: i32, %arg1: memref<4x16x4xf32, #tpu.memory_space<vmem>>, %arg2: memref<4x1x4xf32, #tpu.memory_space<vmem>>, %arg3: memref<4x1x4xf32, #tpu.memory_space<vmem>>, %arg4: memref<8x16x1xf32, #tpu.memory_space<vmem>>, %arg5: memref<4x4x1x1xf32, #tpu.memory_space<vmem>>, %arg6: memref<16x1xf32, #tpu.memory_space<vmem>>, %arg7: memref<8xf32, #tpu.memory_space<smem>>, %arg8: memref<8xf32, #tpu.memory_space<smem>>, %arg9: memref<1xf32, #tpu.memory_space<smem>>, %arg10: memref<4x1x4xf32, #tpu.memory_space<vmem>>) attributes {dimension_semantics = [#tpu.dimension_semantics<parallel>], iteration_bounds = array<i64: 1>, scalar_prefetch = 0 : i64, scratch_operands = 0 : i64, tpu.core_type = #tpu.core_type<tc>, window_params = [{transform_indices = @transform_0, window_bounds = array<i64: 4, 16, 4>}, {transform_indices = @transform_1, window_bounds = array<i64: 4, 1, 4>}, {transform_indices = @transform_2, window_bounds = array<i64: 4, 1, 4>}, {pipeline_mode = #tpu.pipeline_mode<synchronous>, transform_indices = @transform_3, window_bounds = array<i64: 8, 16, 1>}, {pipeline_mode = #tpu.pipeline_mode<synchronous>, transform_indices = @transform_4, window_bounds = array<i64: 4, 4, 1, 1>}, {pipeline_mode = #tpu.pipeline_mode<synchronous>, transform_indices = @transform_5, window_bounds = array<i64: 16, 1>}, {transform_indices = @transform_6, window_bounds = array<i64: 8>}, {transform_indices = @transform_7, window_bounds = array<i64: 8>}, {transform_indices = @transform_8, window_bounds = array<i64: 1>}, {transform_indices = @transform_9, window_bounds = array<i64: 4, 1, 4>}]} {
    %c0 = arith.constant 0 : index
    %c0_0 = arith.constant 0 : index
    %c0_1 = arith.constant 0 : index
    %0 = vector.load %arg2[%c0, %c0_0, %c0_1] : memref<4x1x4xf32, #tpu.memory_space<vmem>>, vector<4x1x4xf32>
    %c0_2 = arith.constant 0 : index
    %c0_3 = arith.constant 0 : index
    %c0_4 = arith.constant 0 : index
    %1 = vector.load %arg1[%c0_2, %c0_3, %c0_4] : memref<4x16x4xf32, #tpu.memory_space<vmem>>, vector<4x16x4xf32>
    %2 = vector.broadcast %0 : vector<4x1x4xf32> to vector<4x16x4xf32>
    %3 = arith.mulf %1, %2 : vector<4x16x4xf32>
    %c0_5 = arith.constant 0 : index
    %c0_6 = arith.constant 0 : index
    %c0_7 = arith.constant 0 : index
    %4 = vector.load %arg3[%c0_5, %c0_6, %c0_7] : memref<4x1x4xf32, #tpu.memory_space<vmem>>, vector<4x1x4xf32>
    %5 = arith.mulf %4, %0 : vector<4x1x4xf32>
    %6 = vector.shape_cast %3 : vector<4x16x4xf32> to vector<4x1x16x4xf32>
    %7 = vector.shape_cast %3 : vector<4x16x4xf32> to vector<1x4x16x4xf32>
    %8 = vector.broadcast %6 : vector<4x1x16x4xf32> to vector<4x4x16x4xf32>
    %9 = vector.broadcast %7 : vector<1x4x16x4xf32> to vector<4x4x16x4xf32>
    %10 = arith.mulf %8, %9 : vector<4x4x16x4xf32>
    %cst = arith.constant 0.000000e+00 : f32
    %11 = vector.broadcast %cst : f32 to vector<4x4x1x4xf32>
    %c0_8 = arith.constant 0 : index
    %c0_9 = arith.constant 0 : index
    %c0_10 = arith.constant 0 : index
    %12 = vector.load %arg4[%c0_8, %c0_9, %c0_10] : memref<8x16x1xf32, #tpu.memory_space<vmem>>, vector<1x16x1xf32>
    %13 = vector.shape_cast %12 : vector<1x16x1xf32> to vector<16x1xf32>
    %14 = vector.shape_cast %13 : vector<16x1xf32> to vector<1x1x16x1xf32>
    %15 = vector.broadcast %14 : vector<1x1x16x1xf32> to vector<4x4x16x4xf32>
    %16 = arith.mulf %10, %15 : vector<4x4x16x4xf32>
    %cst_11 = arith.constant dense<0.000000e+00> : vector<4x4x4xf32>
    %17 = vector.multi_reduction <add>, %16, %cst_11 [2] : vector<4x4x16x4xf32> to vector<4x4x4xf32>
    %18 = vector.shape_cast %17 : vector<4x4x4xf32> to vector<4x4x1x4xf32>
    %c0_12 = arith.constant 0 : index
    %19 = memref.load %arg7[%c0_12] : memref<8xf32, #tpu.memory_space<smem>>
    %20 = vector.broadcast %19 : f32 to vector<4x4x1x4xf32>
    %21 = arith.addf %18, %20 : vector<4x4x1x4xf32>
    %cst_13 = arith.constant 0.000000e+00 : f32
    %22 = vector.broadcast %cst_13 : f32 to vector<4x4x1x4xf32>
    %23 = arith.maximumf %21, %22 : vector<4x4x1x4xf32>
    %c0_14 = arith.constant 0 : index
    %24 = memref.load %arg8[%c0_14] : memref<8xf32, #tpu.memory_space<smem>>
    %25 = vector.broadcast %24 : f32 to vector<4x4x1x4xf32>
    %26 = arith.mulf %23, %25 : vector<4x4x1x4xf32>
    %27 = arith.addf %11, %26 : vector<4x4x1x4xf32>
    %c1 = arith.constant 1 : index
    %c0_15 = arith.constant 0 : index
    %c0_16 = arith.constant 0 : index
    %28 = vector.load %arg4[%c1, %c0_15, %c0_16] : memref<8x16x1xf32, #tpu.memory_space<vmem>>, vector<1x16x1xf32>
    %29 = vector.shape_cast %28 : vector<1x16x1xf32> to vector<16x1xf32>
    %30 = vector.shape_cast %29 : vector<16x1xf32> to vector<1x1x16x1xf32>
    %31 = vector.broadcast %30 : vector<1x1x16x1xf32> to vector<4x4x16x4xf32>
    %32 = arith.mulf %10, %31 : vector<4x4x16x4xf32>
    %cst_17 = arith.constant dense<0.000000e+00> : vector<4x4x4xf32>
    %33 = vector.multi_reduction <add>, %32, %cst_17 [2] : vector<4x4x16x4xf32> to vector<4x4x4xf32>
    %34 = vector.shape_cast %33 : vector<4x4x4xf32> to vector<4x4x1x4xf32>
    %c1_18 = arith.constant 1 : index
    %35 = memref.load %arg7[%c1_18] : memref<8xf32, #tpu.memory_space<smem>>
    %36 = vector.broadcast %35 : f32 to vector<4x4x1x4xf32>
    %37 = arith.addf %34, %36 : vector<4x4x1x4xf32>
    %cst_19 = arith.constant 0.000000e+00 : f32
    %38 = vector.broadcast %cst_19 : f32 to vector<4x4x1x4xf32>
    %39 = arith.maximumf %37, %38 : vector<4x4x1x4xf32>
    %c1_20 = arith.constant 1 : index
    %40 = memref.load %arg8[%c1_20] : memref<8xf32, #tpu.memory_space<smem>>
    %41 = vector.broadcast %40 : f32 to vector<4x4x1x4xf32>
    %42 = arith.mulf %39, %41 : vector<4x4x1x4xf32>
    %43 = arith.addf %27, %42 : vector<4x4x1x4xf32>
    %c2 = arith.constant 2 : index
    %c0_21 = arith.constant 0 : index
    %c0_22 = arith.constant 0 : index
    %44 = vector.load %arg4[%c2, %c0_21, %c0_22] : memref<8x16x1xf32, #tpu.memory_space<vmem>>, vector<1x16x1xf32>
    %45 = vector.shape_cast %44 : vector<1x16x1xf32> to vector<16x1xf32>
    %46 = vector.shape_cast %45 : vector<16x1xf32> to vector<1x1x16x1xf32>
    %47 = vector.broadcast %46 : vector<1x1x16x1xf32> to vector<4x4x16x4xf32>
    %48 = arith.mulf %10, %47 : vector<4x4x16x4xf32>
    %cst_23 = arith.constant dense<0.000000e+00> : vector<4x4x4xf32>
    %49 = vector.multi_reduction <add>, %48, %cst_23 [2] : vector<4x4x16x4xf32> to vector<4x4x4xf32>
    %50 = vector.shape_cast %49 : vector<4x4x4xf32> to vector<4x4x1x4xf32>
    %c2_24 = arith.constant 2 : index
    %51 = memref.load %arg7[%c2_24] : memref<8xf32, #tpu.memory_space<smem>>
    %52 = vector.broadcast %51 : f32 to vector<4x4x1x4xf32>
    %53 = arith.addf %50, %52 : vector<4x4x1x4xf32>
    %cst_25 = arith.constant 0.000000e+00 : f32
    %54 = vector.broadcast %cst_25 : f32 to vector<4x4x1x4xf32>
    %55 = arith.maximumf %53, %54 : vector<4x4x1x4xf32>
    %c2_26 = arith.constant 2 : index
    %56 = memref.load %arg8[%c2_26] : memref<8xf32, #tpu.memory_space<smem>>
    %57 = vector.broadcast %56 : f32 to vector<4x4x1x4xf32>
    %58 = arith.mulf %55, %57 : vector<4x4x1x4xf32>
    %59 = arith.addf %43, %58 : vector<4x4x1x4xf32>
    %c3 = arith.constant 3 : index
    %c0_27 = arith.constant 0 : index
    %c0_28 = arith.constant 0 : index
    %60 = vector.load %arg4[%c3, %c0_27, %c0_28] : memref<8x16x1xf32, #tpu.memory_space<vmem>>, vector<1x16x1xf32>
    %61 = vector.shape_cast %60 : vector<1x16x1xf32> to vector<16x1xf32>
    %62 = vector.shape_cast %61 : vector<16x1xf32> to vector<1x1x16x1xf32>
    %63 = vector.broadcast %62 : vector<1x1x16x1xf32> to vector<4x4x16x4xf32>
    %64 = arith.mulf %10, %63 : vector<4x4x16x4xf32>
    %cst_29 = arith.constant dense<0.000000e+00> : vector<4x4x4xf32>
    %65 = vector.multi_reduction <add>, %64, %cst_29 [2] : vector<4x4x16x4xf32> to vector<4x4x4xf32>
    %66 = vector.shape_cast %65 : vector<4x4x4xf32> to vector<4x4x1x4xf32>
    %c3_30 = arith.constant 3 : index
    %67 = memref.load %arg7[%c3_30] : memref<8xf32, #tpu.memory_space<smem>>
    %68 = vector.broadcast %67 : f32 to vector<4x4x1x4xf32>
    %69 = arith.addf %66, %68 : vector<4x4x1x4xf32>
    %cst_31 = arith.constant 0.000000e+00 : f32
    %70 = vector.broadcast %cst_31 : f32 to vector<4x4x1x4xf32>
    %71 = arith.maximumf %69, %70 : vector<4x4x1x4xf32>
    %c3_32 = arith.constant 3 : index
    %72 = memref.load %arg8[%c3_32] : memref<8xf32, #tpu.memory_space<smem>>
    %73 = vector.broadcast %72 : f32 to vector<4x4x1x4xf32>
    %74 = arith.mulf %71, %73 : vector<4x4x1x4xf32>
    %75 = arith.addf %59, %74 : vector<4x4x1x4xf32>
    %c4 = arith.constant 4 : index
    %c0_33 = arith.constant 0 : index
    %c0_34 = arith.constant 0 : index
    %76 = vector.load %arg4[%c4, %c0_33, %c0_34] : memref<8x16x1xf32, #tpu.memory_space<vmem>>, vector<1x16x1xf32>
    %77 = vector.shape_cast %76 : vector<1x16x1xf32> to vector<16x1xf32>
    %78 = vector.shape_cast %77 : vector<16x1xf32> to vector<1x1x16x1xf32>
    %79 = vector.broadcast %78 : vector<1x1x16x1xf32> to vector<4x4x16x4xf32>
    %80 = arith.mulf %10, %79 : vector<4x4x16x4xf32>
    %cst_35 = arith.constant dense<0.000000e+00> : vector<4x4x4xf32>
    %81 = vector.multi_reduction <add>, %80, %cst_35 [2] : vector<4x4x16x4xf32> to vector<4x4x4xf32>
    %82 = vector.shape_cast %81 : vector<4x4x4xf32> to vector<4x4x1x4xf32>
    %c4_36 = arith.constant 4 : index
    %83 = memref.load %arg7[%c4_36] : memref<8xf32, #tpu.memory_space<smem>>
    %84 = vector.broadcast %83 : f32 to vector<4x4x1x4xf32>
    %85 = arith.addf %82, %84 : vector<4x4x1x4xf32>
    %cst_37 = arith.constant 0.000000e+00 : f32
    %86 = vector.broadcast %cst_37 : f32 to vector<4x4x1x4xf32>
    %87 = arith.maximumf %85, %86 : vector<4x4x1x4xf32>
    %c4_38 = arith.constant 4 : index
    %88 = memref.load %arg8[%c4_38] : memref<8xf32, #tpu.memory_space<smem>>
    %89 = vector.broadcast %88 : f32 to vector<4x4x1x4xf32>
    %90 = arith.mulf %87, %89 : vector<4x4x1x4xf32>
    %91 = arith.addf %75, %90 : vector<4x4x1x4xf32>
    %c5 = arith.constant 5 : index
    %c0_39 = arith.constant 0 : index
    %c0_40 = arith.constant 0 : index
    %92 = vector.load %arg4[%c5, %c0_39, %c0_40] : memref<8x16x1xf32, #tpu.memory_space<vmem>>, vector<1x16x1xf32>
    %93 = vector.shape_cast %92 : vector<1x16x1xf32> to vector<16x1xf32>
    %94 = vector.shape_cast %93 : vector<16x1xf32> to vector<1x1x16x1xf32>
    %95 = vector.broadcast %94 : vector<1x1x16x1xf32> to vector<4x4x16x4xf32>
    %96 = arith.mulf %10, %95 : vector<4x4x16x4xf32>
    %cst_41 = arith.constant dense<0.000000e+00> : vector<4x4x4xf32>
    %97 = vector.multi_reduction <add>, %96, %cst_41 [2] : vector<4x4x16x4xf32> to vector<4x4x4xf32>
    %98 = vector.shape_cast %97 : vector<4x4x4xf32> to vector<4x4x1x4xf32>
    %c5_42 = arith.constant 5 : index
    %99 = memref.load %arg7[%c5_42] : memref<8xf32, #tpu.memory_space<smem>>
    %100 = vector.broadcast %99 : f32 to vector<4x4x1x4xf32>
    %101 = arith.addf %98, %100 : vector<4x4x1x4xf32>
    %cst_43 = arith.constant 0.000000e+00 : f32
    %102 = vector.broadcast %cst_43 : f32 to vector<4x4x1x4xf32>
    %103 = arith.maximumf %101, %102 : vector<4x4x1x4xf32>
    %c5_44 = arith.constant 5 : index
    %104 = memref.load %arg8[%c5_44] : memref<8xf32, #tpu.memory_space<smem>>
    %105 = vector.broadcast %104 : f32 to vector<4x4x1x4xf32>
    %106 = arith.mulf %103, %105 : vector<4x4x1x4xf32>
    %107 = arith.addf %91, %106 : vector<4x4x1x4xf32>
    %c6 = arith.constant 6 : index
    %c0_45 = arith.constant 0 : index
    %c0_46 = arith.constant 0 : index
    %108 = vector.load %arg4[%c6, %c0_45, %c0_46] : memref<8x16x1xf32, #tpu.memory_space<vmem>>, vector<1x16x1xf32>
    %109 = vector.shape_cast %108 : vector<1x16x1xf32> to vector<16x1xf32>
    %110 = vector.shape_cast %109 : vector<16x1xf32> to vector<1x1x16x1xf32>
    %111 = vector.broadcast %110 : vector<1x1x16x1xf32> to vector<4x4x16x4xf32>
    %112 = arith.mulf %10, %111 : vector<4x4x16x4xf32>
    %cst_47 = arith.constant dense<0.000000e+00> : vector<4x4x4xf32>
    %113 = vector.multi_reduction <add>, %112, %cst_47 [2] : vector<4x4x16x4xf32> to vector<4x4x4xf32>
    %114 = vector.shape_cast %113 : vector<4x4x4xf32> to vector<4x4x1x4xf32>
    %c6_48 = arith.constant 6 : index
    %115 = memref.load %arg7[%c6_48] : memref<8xf32, #tpu.memory_space<smem>>
    %116 = vector.broadcast %115 : f32 to vector<4x4x1x4xf32>
    %117 = arith.addf %114, %116 : vector<4x4x1x4xf32>
    %cst_49 = arith.constant 0.000000e+00 : f32
    %118 = vector.broadcast %cst_49 : f32 to vector<4x4x1x4xf32>
    %119 = arith.maximumf %117, %118 : vector<4x4x1x4xf32>
    %c6_50 = arith.constant 6 : index
    %120 = memref.load %arg8[%c6_50] : memref<8xf32, #tpu.memory_space<smem>>
    %121 = vector.broadcast %120 : f32 to vector<4x4x1x4xf32>
    %122 = arith.mulf %119, %121 : vector<4x4x1x4xf32>
    %123 = arith.addf %107, %122 : vector<4x4x1x4xf32>
    %c7 = arith.constant 7 : index
    %c0_51 = arith.constant 0 : index
    %c0_52 = arith.constant 0 : index
    %124 = vector.load %arg4[%c7, %c0_51, %c0_52] : memref<8x16x1xf32, #tpu.memory_space<vmem>>, vector<1x16x1xf32>
    %125 = vector.shape_cast %124 : vector<1x16x1xf32> to vector<16x1xf32>
    %126 = vector.shape_cast %125 : vector<16x1xf32> to vector<1x1x16x1xf32>
    %127 = vector.broadcast %126 : vector<1x1x16x1xf32> to vector<4x4x16x4xf32>
    %128 = arith.mulf %10, %127 : vector<4x4x16x4xf32>
    %cst_53 = arith.constant dense<0.000000e+00> : vector<4x4x4xf32>
    %129 = vector.multi_reduction <add>, %128, %cst_53 [2] : vector<4x4x16x4xf32> to vector<4x4x4xf32>
    %130 = vector.shape_cast %129 : vector<4x4x4xf32> to vector<4x4x1x4xf32>
    %c7_54 = arith.constant 7 : index
    %131 = memref.load %arg7[%c7_54] : memref<8xf32, #tpu.memory_space<smem>>
    %132 = vector.broadcast %131 : f32 to vector<4x4x1x4xf32>
    %133 = arith.addf %130, %132 : vector<4x4x1x4xf32>
    %cst_55 = arith.constant 0.000000e+00 : f32
    %134 = vector.broadcast %cst_55 : f32 to vector<4x4x1x4xf32>
    %135 = arith.maximumf %133, %134 : vector<4x4x1x4xf32>
    %c7_56 = arith.constant 7 : index
    %136 = memref.load %arg8[%c7_56] : memref<8xf32, #tpu.memory_space<smem>>
    %137 = vector.broadcast %136 : f32 to vector<4x4x1x4xf32>
    %138 = arith.mulf %135, %137 : vector<4x4x1x4xf32>
    %139 = arith.addf %123, %138 : vector<4x4x1x4xf32>
    %c0_57 = arith.constant 0 : index
    %c0_58 = arith.constant 0 : index
    %c0_59 = arith.constant 0 : index
    %c0_60 = arith.constant 0 : index
    %140 = vector.load %arg5[%c0_57, %c0_58, %c0_59, %c0_60] : memref<4x4x1x1xf32, #tpu.memory_space<vmem>>, vector<4x4x1x1xf32>
    %141 = vector.broadcast %140 : vector<4x4x1x1xf32> to vector<4x4x1x4xf32>
    %142 = arith.addf %139, %141 : vector<4x4x1x4xf32>
    %cst_61 = arith.constant dense<0xFF800000> : vector<1x4xf32>
    %143 = vector.multi_reduction <maximumf>, %142, %cst_61 [0, 1] : vector<4x4x1x4xf32> to vector<1x4xf32>
    %144 = vector.shape_cast %143 : vector<1x4xf32> to vector<1x1x1x4xf32>
    %145 = vector.broadcast %144 : vector<1x1x1x4xf32> to vector<4x4x1x4xf32>
    %146 = arith.subf %142, %145 : vector<4x4x1x4xf32>
    %147 = math.exp %146 : vector<4x4x1x4xf32>
    %cst_62 = arith.constant dense<0.000000e+00> : vector<1x4xf32>
    %148 = vector.multi_reduction <add>, %147, %cst_62 [0, 1] : vector<4x4x1x4xf32> to vector<1x4xf32>
    %149 = vector.shape_cast %148 : vector<1x4xf32> to vector<1x1x1x4xf32>
    %150 = tpu.reciprocal %149 {approx = true} : vector<1x1x1x4xf32> -> vector<1x1x1x4xf32>
    %151 = vector.broadcast %150 : vector<1x1x1x4xf32> to vector<4x4x1x4xf32>
    %152 = arith.mulf %147, %151 : vector<4x4x1x4xf32>
    %153 = vector.broadcast %152 : vector<4x4x1x4xf32> to vector<4x4x16x4xf32>
    %154 = arith.mulf %10, %153 : vector<4x4x16x4xf32>
    %cst_63 = arith.constant dense<0.000000e+00> : vector<16x4xf32>
    %155 = vector.multi_reduction <add>, %154, %cst_63 [0, 1] : vector<4x4x16x4xf32> to vector<16x4xf32>
    %c0_64 = arith.constant 0 : index
    %c0_65 = arith.constant 0 : index
    %156 = vector.load %arg6[%c0_64, %c0_65] : memref<16x1xf32, #tpu.memory_space<vmem>>, vector<16x1xf32>
    %157 = vector.broadcast %156 : vector<16x1xf32> to vector<16x4xf32>
    %158 = arith.mulf %155, %157 : vector<16x4xf32>
    %cst_66 = arith.constant dense<0.000000e+00> : vector<4xf32>
    %159 = vector.multi_reduction <add>, %158, %cst_66 [0] : vector<16x4xf32> to vector<4xf32>
    %160 = vector.shape_cast %159 : vector<4xf32> to vector<1x4xf32>
    %c0_67 = arith.constant 0 : index
    %161 = memref.load %arg9[%c0_67] : memref<1xf32, #tpu.memory_space<smem>>
    %162 = vector.broadcast %161 : f32 to vector<1x4xf32>
    %163 = arith.addf %160, %162 : vector<1x4xf32>
    %164 = vector.shape_cast %163 : vector<1x4xf32> to vector<1x1x4xf32>
    %165 = vector.broadcast %164 : vector<1x1x4xf32> to vector<4x1x4xf32>
    %166 = arith.addf %5, %165 : vector<4x1x4xf32>
    %c0_68 = arith.constant 0 : index
    %c0_69 = arith.constant 0 : index
    %c0_70 = arith.constant 0 : index
    %167 = vector.load %arg10[%c0_68, %c0_69, %c0_70] : memref<4x1x4xf32, #tpu.memory_space<vmem>>, vector<4x1x4xf32>
    tpu.vector_store %arg10[%c0_68, %c0_69, %c0_70], %166 {strides = array<i32>} : memref<4x1x4xf32, #tpu.memory_space<vmem>>, vector<4x1x4xf32>,
    return
  }
  func.func @transform_0(%arg0: i32) -> (i32, i32, i32) {
    %c0_i32 = arith.constant 0 : i32
    %c0_i32_0 = arith.constant 0 : i32
    %c0_i32_1 = arith.constant 0 : i32
    return %c0_i32, %c0_i32_0, %arg0 : i32, i32, i32
  }
  func.func @transform_1(%arg0: i32) -> (i32, i32, i32) {
    %c0_i32 = arith.constant 0 : i32
    %c0_i32_0 = arith.constant 0 : i32
    %c0_i32_1 = arith.constant 0 : i32
    return %c0_i32, %c0_i32_0, %arg0 : i32, i32, i32
  }
  func.func @transform_2(%arg0: i32) -> (i32, i32, i32) {
    %c0_i32 = arith.constant 0 : i32
    %c0_i32_0 = arith.constant 0 : i32
    %c0_i32_1 = arith.constant 0 : i32
    return %c0_i32, %c0_i32_0, %arg0 : i32, i32, i32
  }
  func.func @transform_3(%arg0: i32) -> (i32, i32, i32) {
    %c0_i32 = arith.constant 0 : i32
    %c0_i32_0 = arith.constant 0 : i32
    %c0_i32_1 = arith.constant 0 : i32
    %c0_i32_2 = arith.constant 0 : i32
    return %c0_i32, %c0_i32_0, %c0_i32_1 : i32, i32, i32
  }
  func.func @transform_4(%arg0: i32) -> (i32, i32, i32, i32) {
    %c0_i32 = arith.constant 0 : i32
    %c0_i32_0 = arith.constant 0 : i32
    %c0_i32_1 = arith.constant 0 : i32
    %c0_i32_2 = arith.constant 0 : i32
    %c0_i32_3 = arith.constant 0 : i32
    return %c0_i32, %c0_i32_0, %c0_i32_1, %c0_i32_2 : i32, i32, i32, i32
  }
  func.func @transform_5(%arg0: i32) -> (i32, i32) {
    %c0_i32 = arith.constant 0 : i32
    %c0_i32_0 = arith.constant 0 : i32
    %c0_i32_1 = arith.constant 0 : i32
    return %c0_i32, %c0_i32_0 : i32, i32
  }
  func.func @transform_6(%arg0: i32) -> i32 {
    %c0_i32 = arith.constant 0 : i32
    %c0_i32_0 = arith.constant 0 : i32
    return %c0_i32 : i32
  }
  func.func @transform_7(%arg0: i32) -> i32 {
    %c0_i32 = arith.constant 0 : i32
    %c0_i32_0 = arith.constant 0 : i32
    return %c0_i32 : i32
  }
  func.func @transform_8(%arg0: i32) -> i32 {
    %c0_i32 = arith.constant 0 : i32
    %c0_i32_0 = arith.constant 0 : i32
    return %c0_i32 : i32
  }
  func.func @transform_9(%arg0: i32) -> (i32, i32, i32) {
    %c0_i32 = arith.constant 0 : i32
    %c0_i32_0 = arith.constant 0 : i32
    %c0_i32_1 = arith.constant 0 : i32
    return %c0_i32, %c0_i32_0, %arg0 : i32, i32, i32
  }
}

</mosaic_0001>

<llo_original>
// kernel: tpu_custom_call.1
$region0: #{tpu_custom_call.1}
  #allocation0 [shape = 'u32[]', space=smem, size = 0x4, offset = 0x4, fixed_abs, tag = 'smem constant byte address 0x4 - core index']
  #allocation1 [shape = 'u32[144,128]{1,0:T(1,128)}', space=vmem, size = 0x12000, scoped, tag = 'internal scratch']
  #allocation2 [shape = 'f32[1]{0:T(128)S(6)}', space=smem, size = 0x200, scoped, tag = 'scoped memory for tpu_custom_call.1']
  %s0 = inlined_call_operand.vmem [shape: f32[4,16,4], index: 0, kind: input, shape index: {}]
  %s1 = inlined_call_operand.vmem [shape: f32[4,1,4], index: 1, kind: input, shape index: {}]
  %s2 = inlined_call_operand.vmem [shape: f32[4,1,4], index: 2, kind: input, shape index: {}]
  %s3 = inlined_call_operand.vmem [shape: f32[8,16,1], index: 3, kind: input, shape index: {}]
  %s4 = inlined_call_operand.vmem [shape: f32[4,4,1,1], index: 4, kind: input, shape index: {}]
  %s5 = inlined_call_operand.vmem [shape: f32[16,1], index: 5, kind: input, shape index: {}]
  %s6 = inlined_call_operand.vmem [shape: f32[8], index: 6, kind: input, shape index: {}]
  %s7 = inlined_call_operand.vmem [shape: f32[8], index: 7, kind: input, shape index: {}]
  %s8 = inlined_call_operand.<no memory space> [shape: f32[1], index: 8, kind: input, shape index: {}]
  %s9 = inlined_call_operand.hbm [shape: f32[4,1,4], index: 9, kind: output, shape index: {}]
  %s10 = sld [smem:[#allocation0]]
  $region54: #{tpu_custom_call.1} parent=0
    _
  %s12 = ssub.s32 1, %s10
  %s13 = scalar_select 0, %s12, %s10
  %14 = sst [smem:[#allocation2]] %s8
  $region1: #{tpu_custom_call.1} parent=0
    #allocation3 [shape = 'u8[512]{0}', space=smem, size = 0x200, scoped, tag = 'input window, operand 6, single buffered']
    #allocation4 [shape = 's32[1]{0}', space=sflag, size = 0x4, scoped, tag = 'scoped memory for tpu_custom_call.1']
    #allocation5 [shape = 's32[1]{0}', space=sflag, size = 0x4, scoped, tag = 'scoped memory for tpu_custom_call.1']
    #allocation6 [shape = 'u8[512]{0}', space=smem, size = 0x200, scoped, tag = 'input window, operand 7, single buffered']
    #allocation7 [shape = 's32[1]{0}', space=sflag, size = 0x4, scoped, tag = 'scoped memory for tpu_custom_call.1']
    #allocation8 [shape = 'u8[2048]{0}', space=vmem, size = 0x800, scoped, tag = 'output window, operand 0, single buffered']
    %15 = vsyncpa [#allocation5], 0
    %16 = vsyncpa [#allocation7], 0
    %17 = vsyncpa [#allocation4], 0
    // Predicated region
    $region2: #{tpu_custom_call.1} parent=1 // pred_check
      _
    $region3: #{tpu_custom_call.1} parent=1 // pred_check_branch
      %19 = sbr.rel (0) target = $region5
    $region4: #{tpu_custom_call.1} parent=1 // pred_region
      _
    $region5: #{tpu_custom_call.1} parent=1 // pred_fallthru
      _
    // Predicated region
    $region6: #{tpu_custom_call.1} parent=1 // pred_check
      _
    $region7: #{tpu_custom_call.1} parent=1 // pred_check_branch
      %21 = sbr.rel (0) target = $region9
    $region8: #{tpu_custom_call.1} parent=1 // pred_region
      _
    $region9: #{tpu_custom_call.1} parent=1 // pred_fallthru
      _
    // Predicated region
    $region10: #{tpu_custom_call.1} parent=1 // pred_check
      _
    $region11: #{tpu_custom_call.1} parent=1 // pred_check_branch
      %23 = sbr.rel (0) target = $region13
    $region12: #{tpu_custom_call.1} parent=1 // pred_region
      _
    $region13: #{tpu_custom_call.1} parent=1 // pred_fallthru
      _
    // Predicated region
    $region14: #{tpu_custom_call.1} parent=1 // pred_check
      _
    $region15: #{tpu_custom_call.1} parent=1 // pred_check_branch
      %25 = sbr.rel (0) target = $region17
    $region16: #{tpu_custom_call.1} parent=1 // pred_region
      _
    $region17: #{tpu_custom_call.1} parent=1 // pred_fallthru
      _
    // Predicated region
    $region18: #{tpu_custom_call.1} parent=1 // pred_check
      _
    $region19: #{tpu_custom_call.1} parent=1 // pred_check_branch
      %27 = sbr.rel (0) target = $region21
    $region20: #{tpu_custom_call.1} parent=1 // pred_region
      _
    $region21: #{tpu_custom_call.1} parent=1 // pred_fallthru
      _
    // Predicated region
    $region22: #{tpu_custom_call.1} parent=1 // pred_check
      _
    $region23: #{tpu_custom_call.1} parent=1 // pred_check_branch
      %29 = sbr.rel (0) target = $region25
    $region24: #{tpu_custom_call.1} parent=1 // pred_region
      _
    $region25: #{tpu_custom_call.1} parent=1 // pred_fallthru
      _
    // Predicated region
    $region26: #{tpu_custom_call.1} parent=1 // pred_check
      _
    $region27: #{tpu_custom_call.1} parent=1 // pred_check_branch
      %31 = sbr.rel (0) target = $region29
    $region28: #{tpu_custom_call.1} parent=1 // pred_region
      %s33 = ssub.s32 16, 16
      %34 = vsyncadd [#allocation5], %s33
      %s36 = sshll.u32 %s6, 4
      %s37 = int_to_ptr.vmem [resolvable:$true] %s36
      %39 = dma.vmem_to_smem %s37, 16, [#allocation3], [#allocation5]
    $region29: #{tpu_custom_call.1} parent=1 // pred_fallthru
      _
    // Predicated region
    $region30: #{tpu_custom_call.1} parent=1 // pred_check
      _
    $region31: #{tpu_custom_call.1} parent=1 // pred_check_branch
      %41 = sbr.rel (0) target = $region33
    $region32: #{tpu_custom_call.1} parent=1 // pred_region
      %s43 = ssub.s32 16, 16
      %44 = vsyncadd [#allocation7], %s43
      %s46 = sshll.u32 %s7, 4
      %s47 = int_to_ptr.vmem [resolvable:$true] %s46
      %49 = dma.vmem_to_smem %s47, 16, [#allocation6], [#allocation7]
    $region33: #{tpu_custom_call.1} parent=1 // pred_fallthru
      _
    // Predicated region
    $region34: #{tpu_custom_call.1} parent=1 // pred_check
      _
    $region35: #{tpu_custom_call.1} parent=1 // pred_check_branch
      %51 = sbr.rel (0) target = $region37
    $region36: #{tpu_custom_call.1} parent=1 // pred_region
      _
    $region37: #{tpu_custom_call.1} parent=1 // pred_fallthru
      _
    // Predicated region
    $region38: #{tpu_custom_call.1} parent=1 // pred_check
      _
    $region39: #{tpu_custom_call.1} parent=1 // pred_check_branch
      %53 = sbr.rel (0) target = $region41
    $region40: #{tpu_custom_call.1} parent=1 // pred_region
      %54 = dma.done [#allocation5], 16
    $region41: #{tpu_custom_call.1} parent=1 // pred_fallthru
      _
    // Predicated region
    $region42: #{tpu_custom_call.1} parent=1 // pred_check
      _
    $region43: #{tpu_custom_call.1} parent=1 // pred_check_branch
      %56 = sbr.rel (0) target = $region45
    $region44: #{tpu_custom_call.1} parent=1 // pred_region
      %57 = dma.done [#allocation7], 16
    $region45: #{tpu_custom_call.1} parent=1 // pred_fallthru
      _
    %58 = sfence
    %v59 = vld [vmem:[%s1] sm:$0x1]
    %v60 = vld [vmem:[%s1 + $0x1] sm:$0x1]
    %v61 = vld [vmem:[%s1 + $0x2] sm:$0x1]
    %v62 = vld [vmem:[%s1 + $0x3] sm:$0x1]
    %v63 = vld [vmem:[%s0] sm:$0xff]
    %v64 = vld [vmem:[%s0 + $0x8] sm:$0xff]
    %v65 = vld [vmem:[%s0 + $0x10] sm:$0xff]
    %v66 = vld [vmem:[%s0 + $0x18] sm:$0xff]
    %v67 = vld [vmem:[%s0 + $0x20] sm:$0xff]
    %v68 = vld [vmem:[%s0 + $0x28] sm:$0xff]
    %v69 = vld [vmem:[%s0 + $0x30] sm:$0xff]
    %v70 = vld [vmem:[%s0 + $0x38] sm:$0xff]
    %v75 = vlaneseq
    %v76 = vshrl.u32 %v75, 7
    %v77 = vsub.s32 0, %v76
    %v78 = vrot.slane %v59, %v77
    %v79 = vlaneseq
    %v80 = vshrl.u32 %v79, 7
    %v81 = vsub.s32 0, %v80
    %v82 = vrot.slane %v60, %v81
    %v83 = vlaneseq
    %v84 = vshrl.u32 %v83, 7
    %v85 = vsub.s32 0, %v84
    %v86 = vrot.slane %v61, %v85
    %v87 = vlaneseq
    %v88 = vshrl.u32 %v87, 7
    %v89 = vsub.s32 0, %v88
    %v90 = vrot.slane %v62, %v89
    %v95 = vmul.f32 %v63, %v78
    %v96 = vmul.f32 %v64, %v78
    %v97 = vmul.f32 %v65, %v82
    %v98 = vmul.f32 %v66, %v82
    %v99 = vmul.f32 %v67, %v86
    %v100 = vmul.f32 %v68, %v86
    %v101 = vmul.f32 %v69, %v90
    %v102 = vmul.f32 %v70, %v90
    %v103 = vld [vmem:[%s2] sm:$0x1]
    %v104 = vld [vmem:[%s2 + $0x1] sm:$0x1]
    %v105 = vld [vmem:[%s2 + $0x2] sm:$0x1]
    %v106 = vld [vmem:[%s2 + $0x3] sm:$0x1]
    %v107 = vmul.f32 %v103, %v59
    %v108 = vmul.f32 %v104, %v60
    %v109 = vmul.f32 %v105, %v61
    %v110 = vmul.f32 %v106, %v62
    %v111 = vmul.f32 %v95, %v95
    %v112 = vmul.f32 %v96, %v96
    %v113 = vmul.f32 %v95, %v97
    %v114 = vmul.f32 %v96, %v98
    %v115 = vmul.f32 %v95, %v99
    %v116 = vmul.f32 %v96, %v100
    %v117 = vmul.f32 %v95, %v101
    %v118 = vmul.f32 %v96, %v102
    %v119 = vmul.f32 %v97, %v97
    %v120 = vmul.f32 %v98, %v98
    %v121 = vmul.f32 %v97, %v99
    %v122 = vmul.f32 %v98, %v100
    %v123 = vmul.f32 %v97, %v101
    %v124 = vmul.f32 %v98, %v102
    %v125 = vmul.f32 %v99, %v99
    %v126 = vmul.f32 %v100, %v100
    %v127 = vmul.f32 %v99, %v101
    %v128 = vmul.f32 %v100, %v102
    %v129 = vmul.f32 %v101, %v101
    %v130 = vmul.f32 %v102, %v102
    %v131 = vld [vmem:[%s3] sm:$0xff]
    %v132 = vld [vmem:[%s3 + $0x8] sm:$0xff]
    %134 = vset.pattern.permute.xlu0 0
    %135 = vperm.xlu0 %134, %v131
    %v136 = vpop.permute.xlu0 %135
    %139 = vset.pattern.permute.xlu0 0
    %140 = vperm.xlu0 %139, %v132
    %v141 = vpop.permute.xlu0 %140
    %v143 = vmul.f32 %v111, %v136
    %v144 = vmul.f32 %v112, %v141
    %v145 = vmul.f32 %v113, %v136
    %v146 = vmul.f32 %v114, %v141
    %v147 = vmul.f32 %v115, %v136
    %v148 = vmul.f32 %v116, %v141
    %v149 = vmul.f32 %v117, %v136
    %v150 = vmul.f32 %v118, %v141
    %v151 = vmul.f32 %v119, %v136
    %v152 = vmul.f32 %v120, %v141
    %v153 = vmul.f32 %v121, %v136
    %v154 = vmul.f32 %v122, %v141
    %v155 = vmul.f32 %v123, %v136
    %v156 = vmul.f32 %v124, %v141
    %v157 = vmul.f32 %v125, %v136
    %v158 = vmul.f32 %v126, %v141
    %v159 = vmul.f32 %v127, %v136
    %v160 = vmul.f32 %v128, %v141
    %v161 = vmul.f32 %v129, %v136
    %v162 = vmul.f32 %v130, %v141
    %vm163 = vcmask 31744
    %v164 = vsel %vm163, %v143, 0.0
    %v165 = vsel %vm163, %v144, 0.0
    %v166 = vadd.f32 %v164, %v165
    %v167 = vrot.slane %v166, 4
    %v168 = vadd.f32 %v166, %v167
    %v169 = vrot.slane %v168, 2
    %v170 = vadd.f32 %v168, %v169
    %v171 = vrot.slane %v170, 1
    %v172 = vadd.f32 %v170, %v171
    %v173 = vsel %vm163, %v145, 0.0
    %v174 = vsel %vm163, %v146, 0.0
    %v175 = vadd.f32 %v173, %v174
    %v176 = vrot.slane %v175, 4
    %v177 = vadd.f32 %v175, %v176
    %v178 = vrot.slane %v177, 2
    %v179 = vadd.f32 %v177, %v178
    %v180 = vrot.slane %v179, 1
    %v181 = vadd.f32 %v179, %v180
    %v182 = vsel %vm163, %v147, 0.0
    %v183 = vsel %vm163, %v148, 0.0
    %v184 = vadd.f32 %v182, %v183
    %v185 = vrot.slane %v184, 4
    %v186 = vadd.f32 %v184, %v185
    %v187 = vrot.slane %v186, 2
    %v188 = vadd.f32 %v186, %v187
    %v189 = vrot.slane %v188, 1
    %v190 = vadd.f32 %v188, %v189
    %v191 = vsel %vm163, %v149, 0.0
    %v192 = vsel %vm163, %v150, 0.0
    %v193 = vadd.f32 %v191, %v192
    %v194 = vrot.slane %v193, 4
    %v195 = vadd.f32 %v193, %v194
    %v196 = vrot.slane %v195, 2
    %v197 = vadd.f32 %v195, %v196
    %v198 = vrot.slane %v197, 1
    %v199 = vadd.f32 %v197, %v198
    %v200 = vsel %vm163, %v151, 0.0
    %v201 = vsel %vm163, %v152, 0.0
    %v202 = vadd.f32 %v200, %v201
    %v203 = vrot.slane %v202, 4
    %v204 = vadd.f32 %v202, %v203
    %v205 = vrot.slane %v204, 2
    %v206 = vadd.f32 %v204, %v205
    %v207 = vrot.slane %v206, 1
    %v208 = vadd.f32 %v206, %v207
    %v209 = vsel %vm163, %v153, 0.0
    %v210 = vsel %vm163, %v154, 0.0
    %v211 = vadd.f32 %v209, %v210
    %v212 = vrot.slane %v211, 4
    %v213 = vadd.f32 %v211, %v212
    %v214 = vrot.slane %v213, 2
    %v215 = vadd.f32 %v213, %v214
    %v216 = vrot.slane %v215, 1
    %v217 = vadd.f32 %v215, %v216
    %v218 = vsel %vm163, %v155, 0.0
    %v219 = vsel %vm163, %v156, 0.0
    %v220 = vadd.f32 %v218, %v219
    %v221 = vrot.slane %v220, 4
    %v222 = vadd.f32 %v220, %v221
    %v223 = vrot.slane %v222, 2
    %v224 = vadd.f32 %v222, %v223
    %v225 = vrot.slane %v224, 1
    %v226 = vadd.f32 %v224, %v225
    %v227 = vsel %vm163, %v157, 0.0
    %v228 = vsel %vm163, %v158, 0.0
    %v229 = vadd.f32 %v227, %v228
    %v230 = vrot.slane %v229, 4
    %v231 = vadd.f32 %v229, %v230
    %v232 = vrot.slane %v231, 2
    %v233 = vadd.f32 %v231, %v232
    %v234 = vrot.slane %v233, 1
    %v235 = vadd.f32 %v233, %v234
    %v236 = vsel %vm163, %v159, 0.0
    %v237 = vsel %vm163, %v160, 0.0
    %v238 = vadd.f32 %v236, %v237
    %v239 = vrot.slane %v238, 4
    %v240 = vadd.f32 %v238, %v239
    %v241 = vrot.slane %v240, 2
    %v242 = vadd.f32 %v240, %v241
    %v243 = vrot.slane %v242, 1
    %v244 = vadd.f32 %v242, %v243
    %v245 = vsel %vm163, %v161, 0.0
    %v246 = vsel %vm163, %v162, 0.0
    %v247 = vadd.f32 %v245, %v246
    %v248 = vrot.slane %v247, 4
    %v249 = vadd.f32 %v247, %v248
    %v250 = vrot.slane %v249, 2
    %v251 = vadd.f32 %v249, %v250
    %v252 = vrot.slane %v251, 1
    %v253 = vadd.f32 %v251, %v252
    %s254 = sld [smem:[#allocation3]]
    %v255 = vstv %s254
    %v256 = vadd.f32 %v172, %v255
    %v257 = vadd.f32 %v181, %v255
    %v258 = vadd.f32 %v190, %v255
    %v259 = vadd.f32 %v199, %v255
    %v260 = vadd.f32 %v208, %v255
    %v261 = vadd.f32 %v217, %v255
    %v262 = vadd.f32 %v226, %v255
    %v263 = vadd.f32 %v235, %v255
    %v264 = vadd.f32 %v244, %v255
    %v265 = vadd.f32 %v253, %v255
    %v266 = vmax.f32 %v256, 0.0
    %v267 = vmax.f32 %v257, 0.0
    %v268 = vmax.f32 %v258, 0.0
    %v269 = vmax.f32 %v259, 0.0
    %v270 = vmax.f32 %v260, 0.0
    %v271 = vmax.f32 %v261, 0.0
    %v272 = vmax.f32 %v262, 0.0
    %v273 = vmax.f32 %v263, 0.0
    %v274 = vmax.f32 %v264, 0.0
    %v275 = vmax.f32 %v265, 0.0
    %s276 = sld [smem:[#allocation6]]
    %v277 = vstv %s276
    %v278 = vmul.f32 %v266, %v277
    %v279 = vmul.f32 %v267, %v277
    %v280 = vmul.f32 %v268, %v277
    %v281 = vmul.f32 %v269, %v277
    %v282 = vmul.f32 %v270, %v277
    %v283 = vmul.f32 %v271, %v277
    %v284 = vmul.f32 %v272, %v277
    %v285 = vmul.f32 %v273, %v277
    %v286 = vmul.f32 %v274, %v277
    %v287 = vmul.f32 %v275, %v277
    %v288 = vadd.f32 %v278, 0.0
    %v289 = vadd.f32 %v279, 0.0
    %v290 = vadd.f32 %v280, 0.0
    %v291 = vadd.f32 %v281, 0.0
    %v292 = vadd.f32 %v282, 0.0
    %v293 = vadd.f32 %v283, 0.0
    %v294 = vadd.f32 %v284, 0.0
    %v295 = vadd.f32 %v285, 0.0
    %v296 = vadd.f32 %v286, 0.0
    %v297 = vadd.f32 %v287, 0.0
    %s298 = scalar_lea.vmem %s3, 16
    %v299 = vld [vmem:[%s298] sm:$0xff]
    %v300 = vld [vmem:[%s298 + $0x8] sm:$0xff]
    %302 = vset.pattern.permute.xlu0 0
    %303 = vperm.xlu0 %302, %v299
    %v304 = vpop.permute.xlu0 %303
    %307 = vset.pattern.permute.xlu0 0
    %308 = vperm.xlu0 %307, %v300
    %v309 = vpop.permute.xlu0 %308
    %v311 = vmul.f32 %v111, %v304
    %v312 = vmul.f32 %v112, %v309
    %v313 = vmul.f32 %v113, %v304
    %v314 = vmul.f32 %v114, %v309
    %v315 = vmul.f32 %v115, %v304
    %v316 = vmul.f32 %v116, %v309
    %v317 = vmul.f32 %v117, %v304
    %v318 = vmul.f32 %v118, %v309
    %v319 = vmul.f32 %v119, %v304
    %v320 = vmul.f32 %v120, %v309
    %v321 = vmul.f32 %v121, %v304
    %v322 = vmul.f32 %v122, %v309
    %v323 = vmul.f32 %v123, %v304
    %v324 = vmul.f32 %v124, %v309
    %v325 = vmul.f32 %v125, %v304
    %v326 = vmul.f32 %v126, %v309
    %v327 = vmul.f32 %v127, %v304
    %v328 = vmul.f32 %v128, %v309
    %v329 = vmul.f32 %v129, %v304
    %v330 = vmul.f32 %v130, %v309
    %v331 = vsel %vm163, %v311, 0.0
    %v332 = vsel %vm163, %v312, 0.0
    %v333 = vadd.f32 %v331, %v332
    %v334 = vrot.slane %v333, 4
    %v335 = vadd.f32 %v333, %v334
    %v336 = vrot.slane %v335, 2
    %v337 = vadd.f32 %v335, %v336
    %v338 = vrot.slane %v337, 1
    %v339 = vadd.f32 %v337, %v338
    %v340 = vsel %vm163, %v313, 0.0
    %v341 = vsel %vm163, %v314, 0.0
    %v342 = vadd.f32 %v340, %v341
    %v343 = vrot.slane %v342, 4
    %v344 = vadd.f32 %v342, %v343
    %v345 = vrot.slane %v344, 2
    %v346 = vadd.f32 %v344, %v345
    %v347 = vrot.slane %v346, 1
    %v348 = vadd.f32 %v346, %v347
    %v349 = vsel %vm163, %v315, 0.0
    %v350 = vsel %vm163, %v316, 0.0
    %v351 = vadd.f32 %v349, %v350
    %v352 = vrot.slane %v351, 4
    %v353 = vadd.f32 %v351, %v352
    %v354 = vrot.slane %v353, 2
    %v355 = vadd.f32 %v353, %v354
    %v356 = vrot.slane %v355, 1
    %v357 = vadd.f32 %v355, %v356
    %v358 = vsel %vm163, %v317, 0.0
    %v359 = vsel %vm163, %v318, 0.0
    %v360 = vadd.f32 %v358, %v359
    %v361 = vrot.slane %v360, 4
    %v362 = vadd.f32 %v360, %v361
    %v363 = vrot.slane %v362, 2
    %v364 = vadd.f32 %v362, %v363
    %v365 = vrot.slane %v364, 1
    %v366 = vadd.f32 %v364, %v365
    %v367 = vsel %vm163, %v319, 0.0
    %v368 = vsel %vm163, %v320, 0.0
    %v369 = vadd.f32 %v367, %v368
    %v370 = vrot.slane %v369, 4
    %v371 = vadd.f32 %v369, %v370
    %v372 = vrot.slane %v371, 2
    %v373 = vadd.f32 %v371, %v372
    %v374 = vrot.slane %v373, 1
    %v375 = vadd.f32 %v373, %v374
    %v376 = vsel %vm163, %v321, 0.0
    %v377 = vsel %vm163, %v322, 0.0
    %v378 = vadd.f32 %v376, %v377
    %v379 = vrot.slane %v378, 4
    %v380 = vadd.f32 %v378, %v379
    %v381 = vrot.slane %v380, 2
    %v382 = vadd.f32 %v380, %v381
    %v383 = vrot.slane %v382, 1
    %v384 = vadd.f32 %v382, %v383
    %v385 = vsel %vm163, %v323, 0.0
    %v386 = vsel %vm163, %v324, 0.0
    %v387 = vadd.f32 %v385, %v386
    %v388 = vrot.slane %v387, 4
    %v389 = vadd.f32 %v387, %v388
    %v390 = vrot.slane %v389, 2
    %v391 = vadd.f32 %v389, %v390
    %v392 = vrot.slane %v391, 1
    %v393 = vadd.f32 %v391, %v392
    %v394 = vsel %vm163, %v325, 0.0
    %v395 = vsel %vm163, %v326, 0.0
    %v396 = vadd.f32 %v394, %v395
    %v397 = vrot.slane %v396, 4
    %v398 = vadd.f32 %v396, %v397
    %v399 = vrot.slane %v398, 2
    %v400 = vadd.f32 %v398, %v399
    %v401 = vrot.slane %v400, 1
    %v402 = vadd.f32 %v400, %v401
    %v403 = vsel %vm163, %v327, 0.0
    %v404 = vsel %vm163, %v328, 0.0
    %v405 = vadd.f32 %v403, %v404
    %v406 = vrot.slane %v405, 4
    %v407 = vadd.f32 %v405, %v406
    %v408 = vrot.slane %v407, 2
    %v409 = vadd.f32 %v407, %v408
    %v410 = vrot.slane %v409, 1
    %v411 = vadd.f32 %v409, %v410
    %v412 = vsel %vm163, %v329, 0.0
    %v413 = vsel %vm163, %v330, 0.0
    %v414 = vadd.f32 %v412, %v413
    %v415 = vrot.slane %v414, 4
    %v416 = vadd.f32 %v414, %v415
    %v417 = vrot.slane %v416, 2
    %v418 = vadd.f32 %v416, %v417
    %v419 = vrot.slane %v418, 1
    %v420 = vadd.f32 %v418, %v419
    %s421 = sld [smem:[#allocation3 + $0x1]]
    %v422 = vstv %s421
    %v423 = vadd.f32 %v339, %v422
    %v424 = vadd.f32 %v348, %v422
    %v425 = vadd.f32 %v357, %v422
    %v426 = vadd.f32 %v366, %v422
    %v427 = vadd.f32 %v375, %v422
    %v428 = vadd.f32 %v384, %v422
    %v429 = vadd.f32 %v393, %v422
    %v430 = vadd.f32 %v402, %v422
    %v431 = vadd.f32 %v411, %v422
    %v432 = vadd.f32 %v420, %v422
    %v433 = vmax.f32 %v423, 0.0
    %v434 = vmax.f32 %v424, 0.0
    %v435 = vmax.f32 %v425, 0.0
    %v436 = vmax.f32 %v426, 0.0
    %v437 = vmax.f32 %v427, 0.0
    %v438 = vmax.f32 %v428, 0.0
    %v439 = vmax.f32 %v429, 0.0
    %v440 = vmax.f32 %v430, 0.0
    %v441 = vmax.f32 %v431, 0.0
    %v442 = vmax.f32 %v432, 0.0
    %s443 = sld [smem:[#allocation6 + $0x1]]
    %v444 = vstv %s443
    %v445 = vmul.f32 %v433, %v444
    %v446 = vmul.f32 %v434, %v444
    %v447 = vmul.f32 %v435, %v444
    %v448 = vmul.f32 %v436, %v444
    %v449 = vmul.f32 %v437, %v444
    %v450 = vmul.f32 %v438, %v444
    %v451 = vmul.f32 %v439, %v444
    %v452 = vmul.f32 %v440, %v444
    %v453 = vmul.f32 %v441, %v444
    %v454 = vmul.f32 %v442, %v444
    %v455 = vadd.f32 %v288, %v445
    %v456 = vadd.f32 %v289, %v446
    %v457 = vadd.f32 %v290, %v447
    %v458 = vadd.f32 %v291, %v448
    %v459 = vadd.f32 %v292, %v449
    %v460 = vadd.f32 %v293, %v450
    %v461 = vadd.f32 %v294, %v451
    %v462 = vadd.f32 %v295, %v452
    %v463 = vadd.f32 %v296, %v453
    %v464 = vadd.f32 %v297, %v454
    %s465 = scalar_lea.vmem %s3, 32
    %v466 = vld [vmem:[%s465] sm:$0xff]
    %v467 = vld [vmem:[%s465 + $0x8] sm:$0xff]
    %469 = vset.pattern.permute.xlu0 0
    %470 = vperm.xlu0 %469, %v466
    %v471 = vpop.permute.xlu0 %470
    %474 = vset.pattern.permute.xlu0 0
    %475 = vperm.xlu0 %474, %v467
    %v476 = vpop.permute.xlu0 %475
    %v478 = vmul.f32 %v111, %v471
    %v479 = vmul.f32 %v112, %v476
    %v480 = vmul.f32 %v113, %v471
    %v481 = vmul.f32 %v114, %v476
    %v482 = vmul.f32 %v115, %v471
    %v483 = vmul.f32 %v116, %v476
    %v484 = vmul.f32 %v117, %v471
    %v485 = vmul.f32 %v118, %v476
    %v486 = vmul.f32 %v119, %v471
    %v487 = vmul.f32 %v120, %v476
    %v488 = vmul.f32 %v121, %v471
    %v489 = vmul.f32 %v122, %v476
    %v490 = vmul.f32 %v123, %v471
    %v491 = vmul.f32 %v124, %v476
    %v492 = vmul.f32 %v125, %v471
    %v493 = vmul.f32 %v126, %v476
    %v494 = vmul.f32 %v127, %v471
    %v495 = vmul.f32 %v128, %v476
    %v496 = vmul.f32 %v129, %v471
    %v497 = vmul.f32 %v130, %v476
    %v498 = vsel %vm163, %v478, 0.0
    %v499 = vsel %vm163, %v479, 0.0
    %v500 = vadd.f32 %v498, %v499
    %v501 = vrot.slane %v500, 4
    %v502 = vadd.f32 %v500, %v501
    %v503 = vrot.slane %v502, 2
    %v504 = vadd.f32 %v502, %v503
    %v505 = vrot.slane %v504, 1
    %v506 = vadd.f32 %v504, %v505
    %v507 = vsel %vm163, %v480, 0.0
    %v508 = vsel %vm163, %v481, 0.0
    %v509 = vadd.f32 %v507, %v508
    %v510 = vrot.slane %v509, 4
    %v511 = vadd.f32 %v509, %v510
    %v512 = vrot.slane %v511, 2
    %v513 = vadd.f32 %v511, %v512
    %v514 = vrot.slane %v513, 1
    %v515 = vadd.f32 %v513, %v514
    %v516 = vsel %vm163, %v482, 0.0
    %v517 = vsel %vm163, %v483, 0.0
    %v518 = vadd.f32 %v516, %v517
    %v519 = vrot.slane %v518, 4
    %v520 = vadd.f32 %v518, %v519
    %v521 = vrot.slane %v520, 2
    %v522 = vadd.f32 %v520, %v521
    %v523 = vrot.slane %v522, 1
    %v524 = vadd.f32 %v522, %v523
    %v525 = vsel %vm163, %v484, 0.0
    %v526 = vsel %vm163, %v485, 0.0
    %v527 = vadd.f32 %v525, %v526
    %v528 = vrot.slane %v527, 4
    %v529 = vadd.f32 %v527, %v528
    %v530 = vrot.slane %v529, 2
    %v531 = vadd.f32 %v529, %v530
    %v532 = vrot.slane %v531, 1
    %v533 = vadd.f32 %v531, %v532
    %v534 = vsel %vm163, %v486, 0.0
    %v535 = vsel %vm163, %v487, 0.0
    %v536 = vadd.f32 %v534, %v535
    %v537 = vrot.slane %v536, 4
    %v538 = vadd.f32 %v536, %v537
    %v539 = vrot.slane %v538, 2
    %v540 = vadd.f32 %v538, %v539
    %v541 = vrot.slane %v540, 1
    %v542 = vadd.f32 %v540, %v541
    %v543 = vsel %vm163, %v488, 0.0
    %v544 = vsel %vm163, %v489, 0.0
    %v545 = vadd.f32 %v543, %v544
    %v546 = vrot.slane %v545, 4
    %v547 = vadd.f32 %v545, %v546
    %v548 = vrot.slane %v547, 2
    %v549 = vadd.f32 %v547, %v548
    %v550 = vrot.slane %v549, 1
    %v551 = vadd.f32 %v549, %v550
    %v552 = vsel %vm163, %v490, 0.0
    %v553 = vsel %vm163, %v491, 0.0
    %v554 = vadd.f32 %v552, %v553
    %v555 = vrot.slane %v554, 4
    %v556 = vadd.f32 %v554, %v555
    %v557 = vrot.slane %v556, 2
    %v558 = vadd.f32 %v556, %v557
    %v559 = vrot.slane %v558, 1
    %v560 = vadd.f32 %v558, %v559
    %v561 = vsel %vm163, %v492, 0.0
    %v562 = vsel %vm163, %v493, 0.0
    %v563 = vadd.f32 %v561, %v562
    %v564 = vrot.slane %v563, 4
    %v565 = vadd.f32 %v563, %v564
    %v566 = vrot.slane %v565, 2
    %v567 = vadd.f32 %v565, %v566
    %v568 = vrot.slane %v567, 1
    %v569 = vadd.f32 %v567, %v568
    %v570 = vsel %vm163, %v494, 0.0
    %v571 = vsel %vm163, %v495, 0.0
    %v572 = vadd.f32 %v570, %v571
    %v573 = vrot.slane %v572, 4
    %v574 = vadd.f32 %v572, %v573
    %v575 = vrot.slane %v574, 2
    %v576 = vadd.f32 %v574, %v575
    %v577 = vrot.slane %v576, 1
    %v578 = vadd.f32 %v576, %v577
    %v579 = vsel %vm163, %v496, 0.0
    %v580 = vsel %vm163, %v497, 0.0
    %v581 = vadd.f32 %v579, %v580
    %v582 = vrot.slane %v581, 4
    %v583 = vadd.f32 %v581, %v582
    %v584 = vrot.slane %v583, 2
    %v585 = vadd.f32 %v583, %v584
    %v586 = vrot.slane %v585, 1
    %v587 = vadd.f32 %v585, %v586
    %s588 = sld [smem:[#allocation3 + $0x2]]
    %v589 = vstv %s588
    %v590 = vadd.f32 %v506, %v589
    %v591 = vadd.f32 %v515, %v589
    %v592 = vadd.f32 %v524, %v589
    %v593 = vadd.f32 %v533, %v589
    %v594 = vadd.f32 %v542, %v589
    %v595 = vadd.f32 %v551, %v589
    %v596 = vadd.f32 %v560, %v589
    %v597 = vadd.f32 %v569, %v589
    %v598 = vadd.f32 %v578, %v589
    %v599 = vadd.f32 %v587, %v589
    %v600 = vmax.f32 %v590, 0.0
    %v601 = vmax.f32 %v591, 0.0
    %v602 = vmax.f32 %v592, 0.0
    %v603 = vmax.f32 %v593, 0.0
    %v604 = vmax.f32 %v594, 0.0
    %v605 = vmax.f32 %v595, 0.0
    %v606 = vmax.f32 %v596, 0.0
    %v607 = vmax.f32 %v597, 0.0
    %v608 = vmax.f32 %v598, 0.0
    %v609 = vmax.f32 %v599, 0.0
    %s610 = sld [smem:[#allocation6 + $0x2]]
    %v611 = vstv %s610
    %v612 = vmul.f32 %v600, %v611
    %v613 = vmul.f32 %v601, %v611
    %v614 = vmul.f32 %v602, %v611
    %v615 = vmul.f32 %v603, %v611
    %v616 = vmul.f32 %v604, %v611
    %v617 = vmul.f32 %v605, %v611
    %v618 = vmul.f32 %v606, %v611
    %v619 = vmul.f32 %v607, %v611
    %v620 = vmul.f32 %v608, %v611
    %v621 = vmul.f32 %v609, %v611
    %v622 = vadd.f32 %v455, %v612
    %v623 = vadd.f32 %v456, %v613
    %v624 = vadd.f32 %v457, %v614
    %v625 = vadd.f32 %v458, %v615
    %v626 = vadd.f32 %v459, %v616
    %v627 = vadd.f32 %v460, %v617
    %v628 = vadd.f32 %v461, %v618
    %v629 = vadd.f32 %v462, %v619
    %v630 = vadd.f32 %v463, %v620
    %v631 = vadd.f32 %v464, %v621
    %s632 = scalar_lea.vmem %s3, 48
    %v633 = vld [vmem:[%s632] sm:$0xff]
    %v634 = vld [vmem:[%s632 + $0x8] sm:$0xff]
    %636 = vset.pattern.permute.xlu0 0
    %637 = vperm.xlu0 %636, %v633
    %v638 = vpop.permute.xlu0 %637
    %641 = vset.pattern.permute.xlu0 0
    %642 = vperm.xlu0 %641, %v634
    %v643 = vpop.permute.xlu0 %642
    %v645 = vmul.f32 %v111, %v638
    %v646 = vmul.f32 %v112, %v643
    %v647 = vmul.f32 %v113, %v638
    %v648 = vmul.f32 %v114, %v643
    %v649 = vmul.f32 %v115, %v638
    %v650 = vmul.f32 %v116, %v643
    %v651 = vmul.f32 %v117, %v638
    %v652 = vmul.f32 %v118, %v643
    %v653 = vmul.f32 %v119, %v638
    %v654 = vmul.f32 %v120, %v643
    %v655 = vmul.f32 %v121, %v638
    %v656 = vmul.f32 %v122, %v643
    %v657 = vmul.f32 %v123, %v638
    %v658 = vmul.f32 %v124, %v643
    %v659 = vmul.f32 %v125, %v638
    %v660 = vmul.f32 %v126, %v643
    %v661 = vmul.f32 %v127, %v638
    %v662 = vmul.f32 %v128, %v643
    %v663 = vmul.f32 %v129, %v638
    %v664 = vmul.f32 %v130, %v643
    %v665 = vsel %vm163, %v645, 0.0
    %v666 = vsel %vm163, %v646, 0.0
    %v667 = vadd.f32 %v665, %v666
    %v668 = vrot.slane %v667, 4
    %v669 = vadd.f32 %v667, %v668
    %v670 = vrot.slane %v669, 2
    %v671 = vadd.f32 %v669, %v670
    %v672 = vrot.slane %v671, 1
    %v673 = vadd.f32 %v671, %v672
    %v674 = vsel %vm163, %v647, 0.0
    %v675 = vsel %vm163, %v648, 0.0
    %v676 = vadd.f32 %v674, %v675
    %v677 = vrot.slane %v676, 4
    %v678 = vadd.f32 %v676, %v677
    %v679 = vrot.slane %v678, 2
    %v680 = vadd.f32 %v678, %v679
    %v681 = vrot.slane %v680, 1
    %v682 = vadd.f32 %v680, %v681
    %v683 = vsel %vm163, %v649, 0.0
    %v684 = vsel %vm163, %v650, 0.0
    %v685 = vadd.f32 %v683, %v684
    %v686 = vrot.slane %v685, 4
    %v687 = vadd.f32 %v685, %v686
    %v688 = vrot.slane %v687, 2
    %v689 = vadd.f32 %v687, %v688
    %v690 = vrot.slane %v689, 1
    %v691 = vadd.f32 %v689, %v690
    %v692 = vsel %vm163, %v651, 0.0
    %v693 = vsel %vm163, %v652, 0.0
    %v694 = vadd.f32 %v692, %v693
    %v695 = vrot.slane %v694, 4
    %v696 = vadd.f32 %v694, %v695
    %v697 = vrot.slane %v696, 2
    %v698 = vadd.f32 %v696, %v697
    %v699 = vrot.slane %v698, 1
    %v700 = vadd.f32 %v698, %v699
    %v701 = vsel %vm163, %v653, 0.0
    %v702 = vsel %vm163, %v654, 0.0
    %v703 = vadd.f32 %v701, %v702
    %v704 = vrot.slane %v703, 4
    %v705 = vadd.f32 %v703, %v704
    %v706 = vrot.slane %v705, 2
    %v707 = vadd.f32 %v705, %v706
    %v708 = vrot.slane %v707, 1
    %v709 = vadd.f32 %v707, %v708
    %v710 = vsel %vm163, %v655, 0.0
    %v711 = vsel %vm163, %v656, 0.0
    %v712 = vadd.f32 %v710, %v711
    %v713 = vrot.slane %v712, 4
    %v714 = vadd.f32 %v712, %v713
    %v715 = vrot.slane %v714, 2
    %v716 = vadd.f32 %v714, %v715
    %v717 = vrot.slane %v716, 1
    %v718 = vadd.f32 %v716, %v717
    %v719 = vsel %vm163, %v657, 0.0
    %v720 = vsel %vm163, %v658, 0.0
    %v721 = vadd.f32 %v719, %v720
    %v722 = vrot.slane %v721, 4
    %v723 = vadd.f32 %v721, %v722
    %v724 = vrot.slane %v723, 2
    %v725 = vadd.f32 %v723, %v724
    %v726 = vrot.slane %v725, 1
    %v727 = vadd.f32 %v725, %v726
    %v728 = vsel %vm163, %v659, 0.0
    %v729 = vsel %vm163, %v660, 0.0
    %v730 = vadd.f32 %v728, %v729
    %v731 = vrot.slane %v730, 4
    %v732 = vadd.f32 %v730, %v731
    %v733 = vrot.slane %v732, 2
    %v734 = vadd.f32 %v732, %v733
    %v735 = vrot.slane %v734, 1
    %v736 = vadd.f32 %v734, %v735
    %v737 = vsel %vm163, %v661, 0.0
    %v738 = vsel %vm163, %v662, 0.0
    %v739 = vadd.f32 %v737, %v738
    %v740 = vrot.slane %v739, 4
    %v741 = vadd.f32 %v739, %v740
    %v742 = vrot.slane %v741, 2
    %v743 = vadd.f32 %v741, %v742
    %v744 = vrot.slane %v743, 1
    %v745 = vadd.f32 %v743, %v744
    %v746 = vsel %vm163, %v663, 0.0
    %v747 = vsel %vm163, %v664, 0.0
    %v748 = vadd.f32 %v746, %v747
    %v749 = vrot.slane %v748, 4
    %v750 = vadd.f32 %v748, %v749
    %v751 = vrot.slane %v750, 2
    %v752 = vadd.f32 %v750, %v751
    %v753 = vrot.slane %v752, 1
    %v754 = vadd.f32 %v752, %v753
    %s755 = sld [smem:[#allocation3 + $0x3]]
    %v756 = vstv %s755
    %v757 = vadd.f32 %v673, %v756
    %v758 = vadd.f32 %v682, %v756
    %v759 = vadd.f32 %v691, %v756
    %v760 = vadd.f32 %v700, %v756
    %v761 = vadd.f32 %v709, %v756
    %v762 = vadd.f32 %v718, %v756
    %v763 = vadd.f32 %v727, %v756
    %v764 = vadd.f32 %v736, %v756
    %v765 = vadd.f32 %v745, %v756
    %v766 = vadd.f32 %v754, %v756
    %v767 = vmax.f32 %v757, 0.0
    %v768 = vmax.f32 %v758, 0.0
    %v769 = vmax.f32 %v759, 0.0
    %v770 = vmax.f32 %v760, 0.0
    %v771 = vmax.f32 %v761, 0.0
    %v772 = vmax.f32 %v762, 0.0
    %v773 = vmax.f32 %v763, 0.0
    %v774 = vmax.f32 %v764, 0.0
    %v775 = vmax.f32 %v765, 0.0
    %v776 = vmax.f32 %v766, 0.0
    %s777 = sld [smem:[#allocation6 + $0x3]]
    %v778 = vstv %s777
    %v779 = vmul.f32 %v767, %v778
    %v780 = vmul.f32 %v768, %v778
    %v781 = vmul.f32 %v769, %v778
    %v782 = vmul.f32 %v770, %v778
    %v783 = vmul.f32 %v771, %v778
    %v784 = vmul.f32 %v772, %v778
    %v785 = vmul.f32 %v773, %v778
    %v786 = vmul.f32 %v774, %v778
    %v787 = vmul.f32 %v775, %v778
    %v788 = vmul.f32 %v776, %v778
    %v789 = vadd.f32 %v622, %v779
    %v790 = vadd.f32 %v623, %v780
    %v791 = vadd.f32 %v624, %v781
    %v792 = vadd.f32 %v625, %v782
    %v793 = vadd.f32 %v626, %v783
    %v794 = vadd.f32 %v627, %v784
    %v795 = vadd.f32 %v628, %v785
    %v796 = vadd.f32 %v629, %v786
    %v797 = vadd.f32 %v630, %v787
    %v798 = vadd.f32 %v631, %v788
    %s799 = scalar_lea.vmem %s3, 64
    %v800 = vld [vmem:[%s799] sm:$0xff]
    %v801 = vld [vmem:[%s799 + $0x8] sm:$0xff]
    %803 = vset.pattern.permute.xlu0 0
    %804 = vperm.xlu0 %803, %v800
    %v805 = vpop.permute.xlu0 %804
    %808 = vset.pattern.permute.xlu0 0
    %809 = vperm.xlu0 %808, %v801
    %v810 = vpop.permute.xlu0 %809
    %v812 = vmul.f32 %v111, %v805
    %v813 = vmul.f32 %v112, %v810
    %v814 = vmul.f32 %v113, %v805
    %v815 = vmul.f32 %v114, %v810
    %v816 = vmul.f32 %v115, %v805
    %v817 = vmul.f32 %v116, %v810
    %v818 = vmul.f32 %v117, %v805
    %v819 = vmul.f32 %v118, %v810
    %v820 = vmul.f32 %v119, %v805
    %v821 = vmul.f32 %v120, %v810
    %v822 = vmul.f32 %v121, %v805
    %v823 = vmul.f32 %v122, %v810
    %v824 = vmul.f32 %v123, %v805
    %v825 = vmul.f32 %v124, %v810
    %v826 = vmul.f32 %v125, %v805
    %v827 = vmul.f32 %v126, %v810
    %v828 = vmul.f32 %v127, %v805
    %v829 = vmul.f32 %v128, %v810
    %v830 = vmul.f32 %v129, %v805
    %v831 = vmul.f32 %v130, %v810
    %v832 = vsel %vm163, %v812, 0.0
    %v833 = vsel %vm163, %v813, 0.0
    %v834 = vadd.f32 %v832, %v833
    %v835 = vrot.slane %v834, 4
    %v836 = vadd.f32 %v834, %v835
    %v837 = vrot.slane %v836, 2
    %v838 = vadd.f32 %v836, %v837
    %v839 = vrot.slane %v838, 1
    %v840 = vadd.f32 %v838, %v839
    %v841 = vsel %vm163, %v814, 0.0
    %v842 = vsel %vm163, %v815, 0.0
    %v843 = vadd.f32 %v841, %v842
    %v844 = vrot.slane %v843, 4
    %v845 = vadd.f32 %v843, %v844
    %v846 = vrot.slane %v845, 2
    %v847 = vadd.f32 %v845, %v846
    %v848 = vrot.slane %v847, 1
    %v849 = vadd.f32 %v847, %v848
    %v850 = vsel %vm163, %v816, 0.0
    %v851 = vsel %vm163, %v817, 0.0
    %v852 = vadd.f32 %v850, %v851
    %v853 = vrot.slane %v852, 4
    %v854 = vadd.f32 %v852, %v853
    %v855 = vrot.slane %v854, 2
    %v856 = vadd.f32 %v854, %v855
    %v857 = vrot.slane %v856, 1
    %v858 = vadd.f32 %v856, %v857
    %v859 = vsel %vm163, %v818, 0.0
    %v860 = vsel %vm163, %v819, 0.0
    %v861 = vadd.f32 %v859, %v860
    %v862 = vrot.slane %v861, 4
    %v863 = vadd.f32 %v861, %v862
    %v864 = vrot.slane %v863, 2
    %v865 = vadd.f32 %v863, %v864
    %v866 = vrot.slane %v865, 1
    %v867 = vadd.f32 %v865, %v866
    %v868 = vsel %vm163, %v820, 0.0
    %v869 = vsel %vm163, %v821, 0.0
    %v870 = vadd.f32 %v868, %v869
    %v871 = vrot.slane %v870, 4
    %v872 = vadd.f32 %v870, %v871
    %v873 = vrot.slane %v872, 2
    %v874 = vadd.f32 %v872, %v873
    %v875 = vrot.slane %v874, 1
    %v876 = vadd.f32 %v874, %v875
    %v877 = vsel %vm163, %v822, 0.0
    %v878 = vsel %vm163, %v823, 0.0
    %v879 = vadd.f32 %v877, %v878
    %v880 = vrot.slane %v879, 4
    %v881 = vadd.f32 %v879, %v880
    %v882 = vrot.slane %v881, 2
    %v883 = vadd.f32 %v881, %v882
    %v884 = vrot.slane %v883, 1
    %v885 = vadd.f32 %v883, %v884
    %v886 = vsel %vm163, %v824, 0.0
    %v887 = vsel %vm163, %v825, 0.0
    %v888 = vadd.f32 %v886, %v887
    %v889 = vrot.slane %v888, 4
    %v890 = vadd.f32 %v888, %v889
    %v891 = vrot.slane %v890, 2
    %v892 = vadd.f32 %v890, %v891
    %v893 = vrot.slane %v892, 1
    %v894 = vadd.f32 %v892, %v893
    %v895 = vsel %vm163, %v826, 0.0
    %v896 = vsel %vm163, %v827, 0.0
    %v897 = vadd.f32 %v895, %v896
    %v898 = vrot.slane %v897, 4
    %v899 = vadd.f32 %v897, %v898
    %v900 = vrot.slane %v899, 2
    %v901 = vadd.f32 %v899, %v900
    %v902 = vrot.slane %v901, 1
    %v903 = vadd.f32 %v901, %v902
    %v904 = vsel %vm163, %v828, 0.0
    %v905 = vsel %vm163, %v829, 0.0
    %v906 = vadd.f32 %v904, %v905
    %v907 = vrot.slane %v906, 4
    %v908 = vadd.f32 %v906, %v907
    %v909 = vrot.slane %v908, 2
    %v910 = vadd.f32 %v908, %v909
    %v911 = vrot.slane %v910, 1
    %v912 = vadd.f32 %v910, %v911
    %v913 = vsel %vm163, %v830, 0.0
    %v914 = vsel %vm163, %v831, 0.0
    %v915 = vadd.f32 %v913, %v914
    %v916 = vrot.slane %v915, 4
    %v917 = vadd.f32 %v915, %v916
    %v918 = vrot.slane %v917, 2
    %v919 = vadd.f32 %v917, %v918
    %v920 = vrot.slane %v919, 1
    %v921 = vadd.f32 %v919, %v920
    %s922 = sld [smem:[#allocation3 + $0x4]]
    %v923 = vstv %s922
    %v924 = vadd.f32 %v840, %v923
    %v925 = vadd.f32 %v849, %v923
    %v926 = vadd.f32 %v858, %v923
    %v927 = vadd.f32 %v867, %v923
    %v928 = vadd.f32 %v876, %v923
    %v929 = vadd.f32 %v885, %v923
    %v930 = vadd.f32 %v894, %v923
    %v931 = vadd.f32 %v903, %v923
    %v932 = vadd.f32 %v912, %v923
    %v933 = vadd.f32 %v921, %v923
    %v934 = vmax.f32 %v924, 0.0
    %v935 = vmax.f32 %v925, 0.0
    %v936 = vmax.f32 %v926, 0.0
    %v937 = vmax.f32 %v927, 0.0
    %v938 = vmax.f32 %v928, 0.0
    %v939 = vmax.f32 %v929, 0.0
    %v940 = vmax.f32 %v930, 0.0
    %v941 = vmax.f32 %v931, 0.0
    %v942 = vmax.f32 %v932, 0.0
    %v943 = vmax.f32 %v933, 0.0
    %s944 = sld [smem:[#allocation6 + $0x4]]
    %v945 = vstv %s944
    %v946 = vmul.f32 %v934, %v945
    %v947 = vmul.f32 %v935, %v945
    %v948 = vmul.f32 %v936, %v945
    %v949 = vmul.f32 %v937, %v945
    %v950 = vmul.f32 %v938, %v945
    %v951 = vmul.f32 %v939, %v945
    %v952 = vmul.f32 %v940, %v945
    %v953 = vmul.f32 %v941, %v945
    %v954 = vmul.f32 %v942, %v945
    %v955 = vmul.f32 %v943, %v945
    %v956 = vadd.f32 %v789, %v946
    %v957 = vadd.f32 %v790, %v947
    %v958 = vadd.f32 %v791, %v948
    %v959 = vadd.f32 %v792, %v949
    %v960 = vadd.f32 %v793, %v950
    %v961 = vadd.f32 %v794, %v951
    %v962 = vadd.f32 %v795, %v952
    %v963 = vadd.f32 %v796, %v953
    %v964 = vadd.f32 %v797, %v954
    %v965 = vadd.f32 %v798, %v955
    %s966 = scalar_lea.vmem %s3, 80
    %v967 = vld [vmem:[%s966] sm:$0xff]
    %v968 = vld [vmem:[%s966 + $0x8] sm:$0xff]
    %970 = vset.pattern.permute.xlu0 0
    %971 = vperm.xlu0 %970, %v967
    %v972 = vpop.permute.xlu0 %971
    %975 = vset.pattern.permute.xlu0 0
    %976 = vperm.xlu0 %975, %v968
    %v977 = vpop.permute.xlu0 %976
    %v979 = vmul.f32 %v111, %v972
    %v980 = vmul.f32 %v112, %v977
    %v981 = vmul.f32 %v113, %v972
    %v982 = vmul.f32 %v114, %v977
    %v983 = vmul.f32 %v115, %v972
    %v984 = vmul.f32 %v116, %v977
    %v985 = vmul.f32 %v117, %v972
    %v986 = vmul.f32 %v118, %v977
    %v987 = vmul.f32 %v119, %v972
    %v988 = vmul.f32 %v120, %v977
    %v989 = vmul.f32 %v121, %v972
    %v990 = vmul.f32 %v122, %v977
    %v991 = vmul.f32 %v123, %v972
    %v992 = vmul.f32 %v124, %v977
    %v993 = vmul.f32 %v125, %v972
    %v994 = vmul.f32 %v126, %v977
    %v995 = vmul.f32 %v127, %v972
    %v996 = vmul.f32 %v128, %v977
    %v997 = vmul.f32 %v129, %v972
    %v998 = vmul.f32 %v130, %v977
    %v999 = vsel %vm163, %v979, 0.0
    %v1000 = vsel %vm163, %v980, 0.0
    %v1001 = vadd.f32 %v999, %v1000
    %v1002 = vrot.slane %v1001, 4
    %v1003 = vadd.f32 %v1001, %v1002
    %v1004 = vrot.slane %v1003, 2
    %v1005 = vadd.f32 %v1003, %v1004
    %v1006 = vrot.slane %v1005, 1
    %v1007 = vadd.f32 %v1005, %v1006
    %v1008 = vsel %vm163, %v981, 0.0
    %v1009 = vsel %vm163, %v982, 0.0
    %v1010 = vadd.f32 %v1008, %v1009
    %v1011 = vrot.slane %v1010, 4
    %v1012 = vadd.f32 %v1010, %v1011
    %v1013 = vrot.slane %v1012, 2
    %v1014 = vadd.f32 %v1012, %v1013
    %v1015 = vrot.slane %v1014, 1
    %v1016 = vadd.f32 %v1014, %v1015
    %v1017 = vsel %vm163, %v983, 0.0
    %v1018 = vsel %vm163, %v984, 0.0
    %v1019 = vadd.f32 %v1017, %v1018
    %v1020 = vrot.slane %v1019, 4
    %v1021 = vadd.f32 %v1019, %v1020
    %v1022 = vrot.slane %v1021, 2
    %v1023 = vadd.f32 %v1021, %v1022
    %v1024 = vrot.slane %v1023, 1
    %v1025 = vadd.f32 %v1023, %v1024
    %v1026 = vsel %vm163, %v985, 0.0
    %v1027 = vsel %vm163, %v986, 0.0
    %v1028 = vadd.f32 %v1026, %v1027
    %v1029 = vrot.slane %v1028, 4
    %v1030 = vadd.f32 %v1028, %v1029
    %v1031 = vrot.slane %v1030, 2
    %v1032 = vadd.f32 %v1030, %v1031
    %v1033 = vrot.slane %v1032, 1
    %v1034 = vadd.f32 %v1032, %v1033
    %v1035 = vsel %vm163, %v987, 0.0
    %v1036 = vsel %vm163, %v988, 0.0
    %v1037 = vadd.f32 %v1035, %v1036
    %v1038 = vrot.slane %v1037, 4
    %v1039 = vadd.f32 %v1037, %v1038
    %v1040 = vrot.slane %v1039, 2
    %v1041 = vadd.f32 %v1039, %v1040
    %v1042 = vrot.slane %v1041, 1
    %v1043 = vadd.f32 %v1041, %v1042
    %v1044 = vsel %vm163, %v989, 0.0
    %v1045 = vsel %vm163, %v990, 0.0
    %v1046 = vadd.f32 %v1044, %v1045
    %v1047 = vrot.slane %v1046, 4
    %v1048 = vadd.f32 %v1046, %v1047
    %v1049 = vrot.slane %v1048, 2
    %v1050 = vadd.f32 %v1048, %v1049
    %v1051 = vrot.slane %v1050, 1
    %v1052 = vadd.f32 %v1050, %v1051
    %v1053 = vsel %vm163, %v991, 0.0
    %v1054 = vsel %vm163, %v992, 0.0
    %v1055 = vadd.f32 %v1053, %v1054
    %v1056 = vrot.slane %v1055, 4
    %v1057 = vadd.f32 %v1055, %v1056
    %v1058 = vrot.slane %v1057, 2
    %v1059 = vadd.f32 %v1057, %v1058
    %v1060 = vrot.slane %v1059, 1
    %v1061 = vadd.f32 %v1059, %v1060
    %v1062 = vsel %vm163, %v993, 0.0
    %v1063 = vsel %vm163, %v994, 0.0
    %v1064 = vadd.f32 %v1062, %v1063
    %v1065 = vrot.slane %v1064, 4
    %v1066 = vadd.f32 %v1064, %v1065
    %v1067 = vrot.slane %v1066, 2
    %v1068 = vadd.f32 %v1066, %v1067
    %v1069 = vrot.slane %v1068, 1
    %v1070 = vadd.f32 %v1068, %v1069
    %v1071 = vsel %vm163, %v995, 0.0
    %v1072 = vsel %vm163, %v996, 0.0
    %v1073 = vadd.f32 %v1071, %v1072
    %v1074 = vrot.slane %v1073, 4
    %v1075 = vadd.f32 %v1073, %v1074
    %v1076 = vrot.slane %v1075, 2
    %v1077 = vadd.f32 %v1075, %v1076
    %v1078 = vrot.slane %v1077, 1
    %v1079 = vadd.f32 %v1077, %v1078
    %v1080 = vsel %vm163, %v997, 0.0
    %v1081 = vsel %vm163, %v998, 0.0
    %v1082 = vadd.f32 %v1080, %v1081
    %v1083 = vrot.slane %v1082, 4
    %v1084 = vadd.f32 %v1082, %v1083
    %v1085 = vrot.slane %v1084, 2
    %v1086 = vadd.f32 %v1084, %v1085
    %v1087 = vrot.slane %v1086, 1
    %v1088 = vadd.f32 %v1086, %v1087
    %s1089 = sld [smem:[#allocation3 + $0x5]]
    %v1090 = vstv %s1089
    %v1091 = vadd.f32 %v1007, %v1090
    %v1092 = vadd.f32 %v1016, %v1090
    %v1093 = vadd.f32 %v1025, %v1090
    %v1094 = vadd.f32 %v1034, %v1090
    %v1095 = vadd.f32 %v1043, %v1090
    %v1096 = vadd.f32 %v1052, %v1090
    %v1097 = vadd.f32 %v1061, %v1090
    %v1098 = vadd.f32 %v1070, %v1090
    %v1099 = vadd.f32 %v1079, %v1090
    %v1100 = vadd.f32 %v1088, %v1090
    %v1101 = vmax.f32 %v1091, 0.0
    %v1102 = vmax.f32 %v1092, 0.0
    %v1103 = vmax.f32 %v1093, 0.0
    %v1104 = vmax.f32 %v1094, 0.0
    %v1105 = vmax.f32 %v1095, 0.0
    %v1106 = vmax.f32 %v1096, 0.0
    %v1107 = vmax.f32 %v1097, 0.0
    %v1108 = vmax.f32 %v1098, 0.0
    %v1109 = vmax.f32 %v1099, 0.0
    %v1110 = vmax.f32 %v1100, 0.0
    %s1111 = sld [smem:[#allocation6 + $0x5]]
    %v1112 = vstv %s1111
    %v1113 = vmul.f32 %v1101, %v1112
    %v1114 = vmul.f32 %v1102, %v1112
    %v1115 = vmul.f32 %v1103, %v1112
    %v1116 = vmul.f32 %v1104, %v1112
    %v1117 = vmul.f32 %v1105, %v1112
    %v1118 = vmul.f32 %v1106, %v1112
    %v1119 = vmul.f32 %v1107, %v1112
    %v1120 = vmul.f32 %v1108, %v1112
    %v1121 = vmul.f32 %v1109, %v1112
    %v1122 = vmul.f32 %v1110, %v1112
    %v1123 = vadd.f32 %v956, %v1113
    %v1124 = vadd.f32 %v957, %v1114
    %v1125 = vadd.f32 %v958, %v1115
    %v1126 = vadd.f32 %v959, %v1116
    %v1127 = vadd.f32 %v960, %v1117
    %v1128 = vadd.f32 %v961, %v1118
    %v1129 = vadd.f32 %v962, %v1119
    %v1130 = vadd.f32 %v963, %v1120
    %v1131 = vadd.f32 %v964, %v1121
    %v1132 = vadd.f32 %v965, %v1122
    %s1133 = scalar_lea.vmem %s3, 96
    %v1134 = vld [vmem:[%s1133] sm:$0xff]
    %v1135 = vld [vmem:[%s1133 + $0x8] sm:$0xff]
    %1137 = vset.pattern.permute.xlu0 0
    %1138 = vperm.xlu0 %1137, %v1134
    %v1139 = vpop.permute.xlu0 %1138
    %1142 = vset.pattern.permute.xlu0 0
    %1143 = vperm.xlu0 %1142, %v1135
    %v1144 = vpop.permute.xlu0 %1143
    %v1146 = vmul.f32 %v111, %v1139
    %v1147 = vmul.f32 %v112, %v1144
    %v1148 = vmul.f32 %v113, %v1139
    %v1149 = vmul.f32 %v114, %v1144
    %v1150 = vmul.f32 %v115, %v1139
    %v1151 = vmul.f32 %v116, %v1144
    %v1152 = vmul.f32 %v117, %v1139
    %v1153 = vmul.f32 %v118, %v1144
    %v1154 = vmul.f32 %v119, %v1139
    %v1155 = vmul.f32 %v120, %v1144
    %v1156 = vmul.f32 %v121, %v1139
    %v1157 = vmul.f32 %v122, %v1144
    %v1158 = vmul.f32 %v123, %v1139
    %v1159 = vmul.f32 %v124, %v1144
    %v1160 = vmul.f32 %v125, %v1139
    %v1161 = vmul.f32 %v126, %v1144
    %v1162 = vmul.f32 %v127, %v1139
    %v1163 = vmul.f32 %v128, %v1144
    %v1164 = vmul.f32 %v129, %v1139
    %v1165 = vmul.f32 %v130, %v1144
    %v1166 = vsel %vm163, %v1146, 0.0
    %v1167 = vsel %vm163, %v1147, 0.0
    %v1168 = vadd.f32 %v1166, %v1167
    %v1169 = vrot.slane %v1168, 4
    %v1170 = vadd.f32 %v1168, %v1169
    %v1171 = vrot.slane %v1170, 2
    %v1172 = vadd.f32 %v1170, %v1171
    %v1173 = vrot.slane %v1172, 1
    %v1174 = vadd.f32 %v1172, %v1173
    %v1175 = vsel %vm163, %v1148, 0.0
    %v1176 = vsel %vm163, %v1149, 0.0
    %v1177 = vadd.f32 %v1175, %v1176
    %v1178 = vrot.slane %v1177, 4
    %v1179 = vadd.f32 %v1177, %v1178
    %v1180 = vrot.slane %v1179, 2
    %v1181 = vadd.f32 %v1179, %v1180
    %v1182 = vrot.slane %v1181, 1
    %v1183 = vadd.f32 %v1181, %v1182
    %v1184 = vsel %vm163, %v1150, 0.0
    %v1185 = vsel %vm163, %v1151, 0.0
    %v1186 = vadd.f32 %v1184, %v1185
    %v1187 = vrot.slane %v1186, 4
    %v1188 = vadd.f32 %v1186, %v1187
    %v1189 = vrot.slane %v1188, 2
    %v1190 = vadd.f32 %v1188, %v1189
    %v1191 = vrot.slane %v1190, 1
    %v1192 = vadd.f32 %v1190, %v1191
    %v1193 = vsel %vm163, %v1152, 0.0
    %v1194 = vsel %vm163, %v1153, 0.0
    %v1195 = vadd.f32 %v1193, %v1194
    %v1196 = vrot.slane %v1195, 4
    %v1197 = vadd.f32 %v1195, %v1196
    %v1198 = vrot.slane %v1197, 2
    %v1199 = vadd.f32 %v1197, %v1198
    %v1200 = vrot.slane %v1199, 1
    %v1201 = vadd.f32 %v1199, %v1200
    %v1202 = vsel %vm163, %v1154, 0.0
    %v1203 = vsel %vm163, %v1155, 0.0
    %v1204 = vadd.f32 %v1202, %v1203
    %v1205 = vrot.slane %v1204, 4
    %v1206 = vadd.f32 %v1204, %v1205
    %v1207 = vrot.slane %v1206, 2
    %v1208 = vadd.f32 %v1206, %v1207
    %v1209 = vrot.slane %v1208, 1
    %v1210 = vadd.f32 %v1208, %v1209
    %v1211 = vsel %vm163, %v1156, 0.0
    %v1212 = vsel %vm163, %v1157, 0.0
    %v1213 = vadd.f32 %v1211, %v1212
    %v1214 = vrot.slane %v1213, 4
    %v1215 = vadd.f32 %v1213, %v1214
    %v1216 = vrot.slane %v1215, 2
    %v1217 = vadd.f32 %v1215, %v1216
    %v1218 = vrot.slane %v1217, 1
    %v1219 = vadd.f32 %v1217, %v1218
    %v1220 = vsel %vm163, %v1158, 0.0
    %v1221 = vsel %vm163, %v1159, 0.0
    %v1222 = vadd.f32 %v1220, %v1221
    %v1223 = vrot.slane %v1222, 4
    %v1224 = vadd.f32 %v1222, %v1223
    %v1225 = vrot.slane %v1224, 2
    %v1226 = vadd.f32 %v1224, %v1225
    %v1227 = vrot.slane %v1226, 1
    %v1228 = vadd.f32 %v1226, %v1227
    %v1229 = vsel %vm163, %v1160, 0.0
    %v1230 = vsel %vm163, %v1161, 0.0
    %v1231 = vadd.f32 %v1229, %v1230
    %v1232 = vrot.slane %v1231, 4
    %v1233 = vadd.f32 %v1231, %v1232
    %v1234 = vrot.slane %v1233, 2
    %v1235 = vadd.f32 %v1233, %v1234
    %v1236 = vrot.slane %v1235, 1
    %v1237 = vadd.f32 %v1235, %v1236
    %v1238 = vsel %vm163, %v1162, 0.0
    %v1239 = vsel %vm163, %v1163, 0.0
    %v1240 = vadd.f32 %v1238, %v1239
    %v1241 = vrot.slane %v1240, 4
    %v1242 = vadd.f32 %v1240, %v1241
    %v1243 = vrot.slane %v1242, 2
    %v1244 = vadd.f32 %v1242, %v1243
    %v1245 = vrot.slane %v1244, 1
    %v1246 = vadd.f32 %v1244, %v1245
    %v1247 = vsel %vm163, %v1164, 0.0
    %v1248 = vsel %vm163, %v1165, 0.0
    %v1249 = vadd.f32 %v1247, %v1248
    %v1250 = vrot.slane %v1249, 4
    %v1251 = vadd.f32 %v1249, %v1250
    %v1252 = vrot.slane %v1251, 2
    %v1253 = vadd.f32 %v1251, %v1252
    %v1254 = vrot.slane %v1253, 1
    %v1255 = vadd.f32 %v1253, %v1254
    %s1256 = sld [smem:[#allocation3 + $0x6]]
    %v1257 = vstv %s1256
    %v1258 = vadd.f32 %v1174, %v1257
    %v1259 = vadd.f32 %v1183, %v1257
    %v1260 = vadd.f32 %v1192, %v1257
    %v1261 = vadd.f32 %v1201, %v1257
    %v1262 = vadd.f32 %v1210, %v1257
    %v1263 = vadd.f32 %v1219, %v1257
    %v1264 = vadd.f32 %v1228, %v1257
    %v1265 = vadd.f32 %v1237, %v1257
    %v1266 = vadd.f32 %v1246, %v1257
    %v1267 = vadd.f32 %v1255, %v1257
    %v1268 = vmax.f32 %v1258, 0.0
    %v1269 = vmax.f32 %v1259, 0.0
    %v1270 = vmax.f32 %v1260, 0.0
    %v1271 = vmax.f32 %v1261, 0.0
    %v1272 = vmax.f32 %v1262, 0.0
    %v1273 = vmax.f32 %v1263, 0.0
    %v1274 = vmax.f32 %v1264, 0.0
    %v1275 = vmax.f32 %v1265, 0.0
    %v1276 = vmax.f32 %v1266, 0.0
    %v1277 = vmax.f32 %v1267, 0.0
    %s1278 = sld [smem:[#allocation6 + $0x6]]
    %v1279 = vstv %s1278
    %v1280 = vmul.f32 %v1268, %v1279
    %v1281 = vmul.f32 %v1269, %v1279
    %v1282 = vmul.f32 %v1270, %v1279
    %v1283 = vmul.f32 %v1271, %v1279
    %v1284 = vmul.f32 %v1272, %v1279
    %v1285 = vmul.f32 %v1273, %v1279
    %v1286 = vmul.f32 %v1274, %v1279
    %v1287 = vmul.f32 %v1275, %v1279
    %v1288 = vmul.f32 %v1276, %v1279
    %v1289 = vmul.f32 %v1277, %v1279
    %v1290 = vadd.f32 %v1123, %v1280
    %v1291 = vadd.f32 %v1124, %v1281
    %v1292 = vadd.f32 %v1125, %v1282
    %v1293 = vadd.f32 %v1126, %v1283
    %v1294 = vadd.f32 %v1127, %v1284
    %v1295 = vadd.f32 %v1128, %v1285
    %v1296 = vadd.f32 %v1129, %v1286
    %v1297 = vadd.f32 %v1130, %v1287
    %v1298 = vadd.f32 %v1131, %v1288
    %v1299 = vadd.f32 %v1132, %v1289
    %s1300 = scalar_lea.vmem %s3, 112
    %v1301 = vld [vmem:[%s1300] sm:$0xff]
    %v1302 = vld [vmem:[%s1300 + $0x8] sm:$0xff]
    %1304 = vset.pattern.permute.xlu0 0
    %1305 = vperm.xlu0 %1304, %v1301
    %v1306 = vpop.permute.xlu0 %1305
    %1309 = vset.pattern.permute.xlu0 0
    %1310 = vperm.xlu0 %1309, %v1302
    %v1311 = vpop.permute.xlu0 %1310
    %v1313 = vmul.f32 %v111, %v1306
    %v1314 = vmul.f32 %v112, %v1311
    %v1315 = vmul.f32 %v113, %v1306
    %v1316 = vmul.f32 %v114, %v1311
    %v1317 = vmul.f32 %v115, %v1306
    %v1318 = vmul.f32 %v116, %v1311
    %v1319 = vmul.f32 %v117, %v1306
    %v1320 = vmul.f32 %v118, %v1311
    %v1321 = vmul.f32 %v119, %v1306
    %v1322 = vmul.f32 %v120, %v1311
    %v1323 = vmul.f32 %v121, %v1306
    %v1324 = vmul.f32 %v122, %v1311
    %v1325 = vmul.f32 %v123, %v1306
    %v1326 = vmul.f32 %v124, %v1311
    %v1327 = vmul.f32 %v125, %v1306
    %v1328 = vmul.f32 %v126, %v1311
    %v1329 = vmul.f32 %v127, %v1306
    %v1330 = vmul.f32 %v128, %v1311
    %v1331 = vmul.f32 %v129, %v1306
    %v1332 = vmul.f32 %v130, %v1311
    %v1333 = vsel %vm163, %v1313, 0.0
    %v1334 = vsel %vm163, %v1314, 0.0
    %v1335 = vadd.f32 %v1333, %v1334
    %v1336 = vrot.slane %v1335, 4
    %v1337 = vadd.f32 %v1335, %v1336
    %v1338 = vrot.slane %v1337, 2
    %v1339 = vadd.f32 %v1337, %v1338
    %v1340 = vrot.slane %v1339, 1
    %v1341 = vadd.f32 %v1339, %v1340
    %v1342 = vsel %vm163, %v1315, 0.0
    %v1343 = vsel %vm163, %v1316, 0.0
    %v1344 = vadd.f32 %v1342, %v1343
    %v1345 = vrot.slane %v1344, 4
    %v1346 = vadd.f32 %v1344, %v1345
    %v1347 = vrot.slane %v1346, 2
    %v1348 = vadd.f32 %v1346, %v1347
    %v1349 = vrot.slane %v1348, 1
    %v1350 = vadd.f32 %v1348, %v1349
    %v1351 = vsel %vm163, %v1317, 0.0
    %v1352 = vsel %vm163, %v1318, 0.0
    %v1353 = vadd.f32 %v1351, %v1352
    %v1354 = vrot.slane %v1353, 4
    %v1355 = vadd.f32 %v1353, %v1354
    %v1356 = vrot.slane %v1355, 2
    %v1357 = vadd.f32 %v1355, %v1356
    %v1358 = vrot.slane %v1357, 1
    %v1359 = vadd.f32 %v1357, %v1358
    %v1360 = vsel %vm163, %v1319, 0.0
    %v1361 = vsel %vm163, %v1320, 0.0
    %v1362 = vadd.f32 %v1360, %v1361
    %v1363 = vrot.slane %v1362, 4
    %v1364 = vadd.f32 %v1362, %v1363
    %v1365 = vrot.slane %v1364, 2
    %v1366 = vadd.f32 %v1364, %v1365
    %v1367 = vrot.slane %v1366, 1
    %v1368 = vadd.f32 %v1366, %v1367
    %v1369 = vsel %vm163, %v1321, 0.0
    %v1370 = vsel %vm163, %v1322, 0.0
    %v1371 = vadd.f32 %v1369, %v1370
    %v1372 = vrot.slane %v1371, 4
    %v1373 = vadd.f32 %v1371, %v1372
    %v1374 = vrot.slane %v1373, 2
    %v1375 = vadd.f32 %v1373, %v1374
    %v1376 = vrot.slane %v1375, 1
    %v1377 = vadd.f32 %v1375, %v1376
    %v1378 = vsel %vm163, %v1323, 0.0
    %v1379 = vsel %vm163, %v1324, 0.0
    %v1380 = vadd.f32 %v1378, %v1379
    %v1381 = vrot.slane %v1380, 4
    %v1382 = vadd.f32 %v1380, %v1381
    %v1383 = vrot.slane %v1382, 2
    %v1384 = vadd.f32 %v1382, %v1383
    %v1385 = vrot.slane %v1384, 1
    %v1386 = vadd.f32 %v1384, %v1385
    %v1387 = vsel %vm163, %v1325, 0.0
    %v1388 = vsel %vm163, %v1326, 0.0
    %v1389 = vadd.f32 %v1387, %v1388
    %v1390 = vrot.slane %v1389, 4
    %v1391 = vadd.f32 %v1389, %v1390
    %v1392 = vrot.slane %v1391, 2
    %v1393 = vadd.f32 %v1391, %v1392
    %v1394 = vrot.slane %v1393, 1
    %v1395 = vadd.f32 %v1393, %v1394
    %v1396 = vsel %vm163, %v1327, 0.0
    %v1397 = vsel %vm163, %v1328, 0.0
    %v1398 = vadd.f32 %v1396, %v1397
    %v1399 = vrot.slane %v1398, 4
    %v1400 = vadd.f32 %v1398, %v1399
    %v1401 = vrot.slane %v1400, 2
    %v1402 = vadd.f32 %v1400, %v1401
    %v1403 = vrot.slane %v1402, 1
    %v1404 = vadd.f32 %v1402, %v1403
    %v1405 = vsel %vm163, %v1329, 0.0
    %v1406 = vsel %vm163, %v1330, 0.0
    %v1407 = vadd.f32 %v1405, %v1406
    %v1408 = vrot.slane %v1407, 4
    %v1409 = vadd.f32 %v1407, %v1408
    %v1410 = vrot.slane %v1409, 2
    %v1411 = vadd.f32 %v1409, %v1410
    %v1412 = vrot.slane %v1411, 1
    %v1413 = vadd.f32 %v1411, %v1412
    %v1414 = vsel %vm163, %v1331, 0.0
    %v1415 = vsel %vm163, %v1332, 0.0
    %v1416 = vadd.f32 %v1414, %v1415
    %v1417 = vrot.slane %v1416, 4
    %v1418 = vadd.f32 %v1416, %v1417
    %v1419 = vrot.slane %v1418, 2
    %v1420 = vadd.f32 %v1418, %v1419
    %v1421 = vrot.slane %v1420, 1
    %v1422 = vadd.f32 %v1420, %v1421
    %s1423 = sld [smem:[#allocation3 + $0x7]]
    %v1424 = vstv %s1423
    %v1425 = vadd.f32 %v1341, %v1424
    %v1426 = vadd.f32 %v1350, %v1424
    %v1427 = vadd.f32 %v1359, %v1424
    %v1428 = vadd.f32 %v1368, %v1424
    %v1429 = vadd.f32 %v1377, %v1424
    %v1430 = vadd.f32 %v1386, %v1424
    %v1431 = vadd.f32 %v1395, %v1424
    %v1432 = vadd.f32 %v1404, %v1424
    %v1433 = vadd.f32 %v1413, %v1424
    %v1434 = vadd.f32 %v1422, %v1424
    %v1435 = vmax.f32 %v1425, 0.0
    %v1436 = vmax.f32 %v1426, 0.0
    %v1437 = vmax.f32 %v1427, 0.0
    %v1438 = vmax.f32 %v1428, 0.0
    %v1439 = vmax.f32 %v1429, 0.0
    %v1440 = vmax.f32 %v1430, 0.0
    %v1441 = vmax.f32 %v1431, 0.0
    %v1442 = vmax.f32 %v1432, 0.0
    %v1443 = vmax.f32 %v1433, 0.0
    %v1444 = vmax.f32 %v1434, 0.0
    %s1445 = sld [smem:[#allocation6 + $0x7]]
    %v1446 = vstv %s1445
    %v1447 = vmul.f32 %v1435, %v1446
    %v1448 = vmul.f32 %v1436, %v1446
    %v1449 = vmul.f32 %v1437, %v1446
    %v1450 = vmul.f32 %v1438, %v1446
    %v1451 = vmul.f32 %v1439, %v1446
    %v1452 = vmul.f32 %v1440, %v1446
    %v1453 = vmul.f32 %v1441, %v1446
    %v1454 = vmul.f32 %v1442, %v1446
    %v1455 = vmul.f32 %v1443, %v1446
    %v1456 = vmul.f32 %v1444, %v1446
    %v1457 = vadd.f32 %v1290, %v1447
    %v1458 = vadd.f32 %v1291, %v1448
    %v1459 = vadd.f32 %v1292, %v1449
    %v1460 = vadd.f32 %v1293, %v1450
    %v1461 = vadd.f32 %v1294, %v1451
    %v1462 = vadd.f32 %v1295, %v1452
    %v1463 = vadd.f32 %v1296, %v1453
    %v1464 = vadd.f32 %v1297, %v1454
    %v1465 = vadd.f32 %v1298, %v1455
    %v1466 = vadd.f32 %v1299, %v1456
    %v1467 = vld [vmem:[%s4] sm:$0x1]
    %v1468 = vld [vmem:[%s4 + $0x1] sm:$0x1]
    %v1469 = vld [vmem:[%s4 + $0x2] sm:$0x1]
    %v1470 = vld [vmem:[%s4 + $0x3] sm:$0x1]
    %v1471 = vld [vmem:[%s4 + $0x4] sm:$0x1]
    %v1472 = vld [vmem:[%s4 + $0x5] sm:$0x1]
    %v1473 = vld [vmem:[%s4 + $0x6] sm:$0x1]
    %v1474 = vld [vmem:[%s4 + $0x7] sm:$0x1]
    %v1475 = vld [vmem:[%s4 + $0x8] sm:$0x1]
    %v1476 = vld [vmem:[%s4 + $0x9] sm:$0x1]
    %v1477 = vld [vmem:[%s4 + $0xa] sm:$0x1]
    %v1478 = vld [vmem:[%s4 + $0xb] sm:$0x1]
    %v1479 = vld [vmem:[%s4 + $0xc] sm:$0x1]
    %v1480 = vld [vmem:[%s4 + $0xd] sm:$0x1]
    %v1481 = vld [vmem:[%s4 + $0xe] sm:$0x1]
    %v1482 = vld [vmem:[%s4 + $0xf] sm:$0x1]
    %1484 = vset.pattern.permute.xlu0 0
    %1485 = vperm.xlu0 %1484, %v1467
    %v1486 = vpop.permute.xlu0 %1485
    %v1488 = vlaneseq
    %v1489 = vshrl.u32 %v1488, 7
    %v1490 = vsub.s32 0, %v1489
    %v1491 = vrot.slane %v1486, %v1490
    %1493 = vset.pattern.permute.xlu0 0
    %1494 = vperm.xlu0 %1493, %v1468
    %v1495 = vpop.permute.xlu0 %1494
    %v1497 = vlaneseq
    %v1498 = vshrl.u32 %v1497, 7
    %v1499 = vsub.s32 0, %v1498
    %v1500 = vrot.slane %v1495, %v1499
    %1502 = vset.pattern.permute.xlu0 0
    %1503 = vperm.xlu0 %1502, %v1469
    %v1504 = vpop.permute.xlu0 %1503
    %v1506 = vlaneseq
    %v1507 = vshrl.u32 %v1506, 7
    %v1508 = vsub.s32 0, %v1507
    %v1509 = vrot.slane %v1504, %v1508
    %1511 = vset.pattern.permute.xlu0 0
    %1512 = vperm.xlu0 %1511, %v1470
    %v1513 = vpop.permute.xlu0 %1512
    %v1515 = vlaneseq
    %v1516 = vshrl.u32 %v1515, 7
    %v1517 = vsub.s32 0, %v1516
    %v1518 = vrot.slane %v1513, %v1517
    %1520 = vset.pattern.permute.xlu0 0
    %1521 = vperm.xlu0 %1520, %v1471
    %v1522 = vpop.permute.xlu0 %1521
    %v1524 = vlaneseq
    %v1525 = vshrl.u32 %v1524, 7
    %v1526 = vsub.s32 0, %v1525
    %v1527 = vrot.slane %v1522, %v1526
    %1529 = vset.pattern.permute.xlu0 0
    %1530 = vperm.xlu0 %1529, %v1472
    %v1531 = vpop.permute.xlu0 %1530
    %v1533 = vlaneseq
    %v1534 = vshrl.u32 %v1533, 7
    %v1535 = vsub.s32 0, %v1534
    %v1536 = vrot.slane %v1531, %v1535
    %1538 = vset.pattern.permute.xlu0 0
    %1539 = vperm.xlu0 %1538, %v1473
    %v1540 = vpop.permute.xlu0 %1539
    %v1542 = vlaneseq
    %v1543 = vshrl.u32 %v1542, 7
    %v1544 = vsub.s32 0, %v1543
    %v1545 = vrot.slane %v1540, %v1544
    %1547 = vset.pattern.permute.xlu0 0
    %1548 = vperm.xlu0 %1547, %v1474
    %v1549 = vpop.permute.xlu0 %1548
    %v1551 = vlaneseq
    %v1552 = vshrl.u32 %v1551, 7
    %v1553 = vsub.s32 0, %v1552
    %v1554 = vrot.slane %v1549, %v1553
    %1556 = vset.pattern.permute.xlu0 0
    %1557 = vperm.xlu0 %1556, %v1475
    %v1558 = vpop.permute.xlu0 %1557
    %v1560 = vlaneseq
    %v1561 = vshrl.u32 %v1560, 7
    %v1562 = vsub.s32 0, %v1561
    %v1563 = vrot.slane %v1558, %v1562
    %1565 = vset.pattern.permute.xlu0 0
    %1566 = vperm.xlu0 %1565, %v1476
    %v1567 = vpop.permute.xlu0 %1566
    %v1569 = vlaneseq
    %v1570 = vshrl.u32 %v1569, 7
    %v1571 = vsub.s32 0, %v1570
    %v1572 = vrot.slane %v1567, %v1571
    %1574 = vset.pattern.permute.xlu0 0
    %1575 = vperm.xlu0 %1574, %v1477
    %v1576 = vpop.permute.xlu0 %1575
    %v1578 = vlaneseq
    %v1579 = vshrl.u32 %v1578, 7
    %v1580 = vsub.s32 0, %v1579
    %v1581 = vrot.slane %v1576, %v1580
    %1583 = vset.pattern.permute.xlu0 0
    %1584 = vperm.xlu0 %1583, %v1478
    %v1585 = vpop.permute.xlu0 %1584
    %v1587 = vlaneseq
    %v1588 = vshrl.u32 %v1587, 7
    %v1589 = vsub.s32 0, %v1588
    %v1590 = vrot.slane %v1585, %v1589
    %1592 = vset.pattern.permute.xlu0 0
    %1593 = vperm.xlu0 %1592, %v1479
    %v1594 = vpop.permute.xlu0 %1593
    %v1596 = vlaneseq
    %v1597 = vshrl.u32 %v1596, 7
    %v1598 = vsub.s32 0, %v1597
    %v1599 = vrot.slane %v1594, %v1598
    %1601 = vset.pattern.permute.xlu0 0
    %1602 = vperm.xlu0 %1601, %v1480
    %v1603 = vpop.permute.xlu0 %1602
    %v1605 = vlaneseq
    %v1606 = vshrl.u32 %v1605, 7
    %v1607 = vsub.s32 0, %v1606
    %v1608 = vrot.slane %v1603, %v1607
    %1610 = vset.pattern.permute.xlu0 0
    %1611 = vperm.xlu0 %1610, %v1481
    %v1612 = vpop.permute.xlu0 %1611
    %v1614 = vlaneseq
    %v1615 = vshrl.u32 %v1614, 7
    %v1616 = vsub.s32 0, %v1615
    %v1617 = vrot.slane %v1612, %v1616
    %1619 = vset.pattern.permute.xlu0 0
    %1620 = vperm.xlu0 %1619, %v1482
    %v1621 = vpop.permute.xlu0 %1620
    %v1623 = vlaneseq
    %v1624 = vshrl.u32 %v1623, 7
    %v1625 = vsub.s32 0, %v1624
    %v1626 = vrot.slane %v1621, %v1625
    %v1627 = vadd.f32 %v1457, %v1491
    %v1628 = vadd.f32 %v1458, %v1500
    %v1629 = vadd.f32 %v1459, %v1509
    %v1630 = vadd.f32 %v1460, %v1518
    %v1631 = vadd.f32 %v1458, %v1527
    %v1632 = vadd.f32 %v1461, %v1536
    %v1633 = vadd.f32 %v1462, %v1545
    %v1634 = vadd.f32 %v1463, %v1554
    %v1635 = vadd.f32 %v1459, %v1563
    %v1636 = vadd.f32 %v1462, %v1572
    %v1637 = vadd.f32 %v1464, %v1581
    %v1638 = vadd.f32 %v1465, %v1590
    %v1639 = vadd.f32 %v1460, %v1599
    %v1640 = vadd.f32 %v1463, %v1608
    %v1641 = vadd.f32 %v1465, %v1617
    %v1642 = vadd.f32 %v1466, %v1626
    %v1643 = vsel %vm163, %v1627, -inf
    %v1644 = vsel %vm163, %v1628, -inf
    %v1645 = vsel %vm163, %v1629, -inf
    %v1646 = vsel %vm163, %v1630, -inf
    %v1647 = vsel %vm163, %v1631, -inf
    %v1648 = vmax.f32 %v1643, %v1647
    %v1649 = vsel %vm163, %v1632, -inf
    %v1650 = vmax.f32 %v1644, %v1649
    %v1651 = vsel %vm163, %v1633, -inf
    %v1652 = vmax.f32 %v1645, %v1651
    %v1653 = vsel %vm163, %v1634, -inf
    %v1654 = vmax.f32 %v1646, %v1653
    %v1655 = vsel %vm163, %v1635, -inf
    %v1656 = vmax.f32 %v1648, %v1655
    %v1657 = vsel %vm163, %v1636, -inf
    %v1658 = vmax.f32 %v1650, %v1657
    %v1659 = vsel %vm163, %v1637, -inf
    %v1660 = vmax.f32 %v1652, %v1659
    %v1661 = vsel %vm163, %v1638, -inf
    %v1662 = vmax.f32 %v1654, %v1661
    %v1663 = vsel %vm163, %v1639, -inf
    %v1664 = vmax.f32 %v1656, %v1663
    %v1665 = vsel %vm163, %v1640, -inf
    %v1666 = vmax.f32 %v1658, %v1665
    %v1667 = vsel %vm163, %v1641, -inf
    %v1668 = vmax.f32 %v1660, %v1667
    %v1669 = vsel %vm163, %v1642, -inf
    %v1670 = vmax.f32 %v1662, %v1669
    %v1671 = vmax.f32 %v1664, %v1666
    %v1672 = vmax.f32 %v1668, %v1670
    %v1673 = vmax.f32 %v1671, %v1672
    %v1674 = vsub.f32 %v1627, %v1673
    %v1675 = vsub.f32 %v1628, %v1673
    %v1676 = vsub.f32 %v1629, %v1673
    %v1677 = vsub.f32 %v1630, %v1673
    %v1678 = vsub.f32 %v1631, %v1673
    %v1679 = vsub.f32 %v1632, %v1673
    %v1680 = vsub.f32 %v1633, %v1673
    %v1681 = vsub.f32 %v1634, %v1673
    %v1682 = vsub.f32 %v1635, %v1673
    %v1683 = vsub.f32 %v1636, %v1673
    %v1684 = vsub.f32 %v1637, %v1673
    %v1685 = vsub.f32 %v1638, %v1673
    %v1686 = vsub.f32 %v1639, %v1673
    %v1687 = vsub.f32 %v1640, %v1673
    %v1688 = vsub.f32 %v1641, %v1673
    %v1689 = vsub.f32 %v1642, %v1673
    %v1690 = vmul.f32 %v1674, 1.442695
    %v1691 = vpow.pop %v1690
    %v1692 = vmul.f32 %v1675, 1.442695
    %v1693 = vpow.pop %v1692
    %v1694 = vmul.f32 %v1676, 1.442695
    %v1695 = vpow.pop %v1694
    %v1696 = vmul.f32 %v1677, 1.442695
    %v1697 = vpow.pop %v1696
    %v1698 = vmul.f32 %v1678, 1.442695
    %v1699 = vpow.pop %v1698
    %v1700 = vmul.f32 %v1679, 1.442695
    %v1701 = vpow.pop %v1700
    %v1702 = vmul.f32 %v1680, 1.442695
    %v1703 = vpow.pop %v1702
    %v1704 = vmul.f32 %v1681, 1.442695
    %v1705 = vpow.pop %v1704
    %v1706 = vmul.f32 %v1682, 1.442695
    %v1707 = vpow.pop %v1706
    %v1708 = vmul.f32 %v1683, 1.442695
    %v1709 = vpow.pop %v1708
    %v1710 = vmul.f32 %v1684, 1.442695
    %v1711 = vpow.pop %v1710
    %v1712 = vmul.f32 %v1685, 1.442695
    %v1713 = vpow.pop %v1712
    %v1714 = vmul.f32 %v1686, 1.442695
    %v1715 = vpow.pop %v1714
    %v1716 = vmul.f32 %v1687, 1.442695
    %v1717 = vpow.pop %v1716
    %v1718 = vmul.f32 %v1688, 1.442695
    %v1719 = vpow.pop %v1718
    %v1720 = vmul.f32 %v1689, 1.442695
    %v1721 = vpow.pop %v1720
    %v1722 = vsel %vm163, %v1691, 0.0
    %v1723 = vsel %vm163, %v1693, 0.0
    %v1724 = vadd.f32 %v1722, %v1723
    %v1725 = vsel %vm163, %v1695, 0.0
    %v1726 = vadd.f32 %v1724, %v1725
    %v1727 = vsel %vm163, %v1697, 0.0
    %v1728 = vadd.f32 %v1726, %v1727
    %v1729 = vsel %vm163, %v1699, 0.0
    %v1730 = vadd.f32 %v1728, %v1729
    %v1731 = vsel %vm163, %v1701, 0.0
    %v1732 = vadd.f32 %v1730, %v1731
    %v1733 = vsel %vm163, %v1703, 0.0
    %v1734 = vadd.f32 %v1732, %v1733
    %v1735 = vsel %vm163, %v1705, 0.0
    %v1736 = vadd.f32 %v1734, %v1735
    %v1737 = vsel %vm163, %v1707, 0.0
    %v1738 = vadd.f32 %v1736, %v1737
    %v1739 = vsel %vm163, %v1709, 0.0
    %v1740 = vadd.f32 %v1738, %v1739
    %v1741 = vsel %vm163, %v1711, 0.0
    %v1742 = vadd.f32 %v1740, %v1741
    %v1743 = vsel %vm163, %v1713, 0.0
    %v1744 = vadd.f32 %v1742, %v1743
    %v1745 = vsel %vm163, %v1715, 0.0
    %v1746 = vadd.f32 %v1744, %v1745
    %v1747 = vsel %vm163, %v1717, 0.0
    %v1748 = vadd.f32 %v1746, %v1747
    %v1749 = vsel %vm163, %v1719, 0.0
    %v1750 = vadd.f32 %v1748, %v1749
    %v1751 = vsel %vm163, %v1721, 0.0
    %v1752 = vadd.f32 %v1750, %v1751
    %v1753 = vrcp.pop %v1752
    %v1754 = vmul.f32 %v1691, %v1753
    %v1755 = vmul.f32 %v1693, %v1753
    %v1756 = vmul.f32 %v1695, %v1753
    %v1757 = vmul.f32 %v1697, %v1753
    %v1758 = vmul.f32 %v1699, %v1753
    %v1759 = vmul.f32 %v1701, %v1753
    %v1760 = vmul.f32 %v1703, %v1753
    %v1761 = vmul.f32 %v1705, %v1753
    %v1762 = vmul.f32 %v1707, %v1753
    %v1763 = vmul.f32 %v1709, %v1753
    %v1764 = vmul.f32 %v1711, %v1753
    %v1765 = vmul.f32 %v1713, %v1753
    %v1766 = vmul.f32 %v1715, %v1753
    %v1767 = vmul.f32 %v1717, %v1753
    %v1768 = vmul.f32 %v1719, %v1753
    %v1769 = vmul.f32 %v1721, %v1753
    %v1770 = vmul.f32 %v111, %v1754
    %v1771 = vmul.f32 %v112, %v1754
    %v1772 = vmul.f32 %v113, %v1755
    %v1773 = vmul.f32 %v114, %v1755
    %v1774 = vmul.f32 %v115, %v1756
    %v1775 = vmul.f32 %v116, %v1756
    %v1776 = vmul.f32 %v117, %v1757
    %v1777 = vmul.f32 %v118, %v1757
    %v1778 = vmul.f32 %v113, %v1758
    %v1779 = vmul.f32 %v114, %v1758
    %v1780 = vmul.f32 %v119, %v1759
    %v1781 = vmul.f32 %v120, %v1759
    %v1782 = vmul.f32 %v121, %v1760
    %v1783 = vmul.f32 %v122, %v1760
    %v1784 = vmul.f32 %v123, %v1761
    %v1785 = vmul.f32 %v124, %v1761
    %v1786 = vmul.f32 %v115, %v1762
    %v1787 = vmul.f32 %v116, %v1762
    %v1788 = vmul.f32 %v121, %v1763
    %v1789 = vmul.f32 %v122, %v1763
    %v1790 = vmul.f32 %v125, %v1764
    %v1791 = vmul.f32 %v126, %v1764
    %v1792 = vmul.f32 %v127, %v1765
    %v1793 = vmul.f32 %v128, %v1765
    %v1794 = vmul.f32 %v117, %v1766
    %v1795 = vmul.f32 %v118, %v1766
    %v1796 = vmul.f32 %v123, %v1767
    %v1797 = vmul.f32 %v124, %v1767
    %v1798 = vmul.f32 %v127, %v1768
    %v1799 = vmul.f32 %v128, %v1768
    %v1800 = vmul.f32 %v129, %v1769
    %v1801 = vmul.f32 %v130, %v1769
    %v1802 = vsel %vm163, %v1770, 0.0
    %v1803 = vsel %vm163, %v1772, 0.0
    %v1804 = vadd.f32 %v1802, %v1803
    %v1805 = vsel %vm163, %v1774, 0.0
    %v1806 = vadd.f32 %v1804, %v1805
    %v1807 = vsel %vm163, %v1776, 0.0
    %v1808 = vadd.f32 %v1806, %v1807
    %v1809 = vsel %vm163, %v1778, 0.0
    %v1810 = vadd.f32 %v1808, %v1809
    %v1811 = vsel %vm163, %v1780, 0.0
    %v1812 = vadd.f32 %v1810, %v1811
    %v1813 = vsel %vm163, %v1782, 0.0
    %v1814 = vadd.f32 %v1812, %v1813
    %v1815 = vsel %vm163, %v1784, 0.0
    %v1816 = vadd.f32 %v1814, %v1815
    %v1817 = vsel %vm163, %v1786, 0.0
    %v1818 = vadd.f32 %v1816, %v1817
    %v1819 = vsel %vm163, %v1788, 0.0
    %v1820 = vadd.f32 %v1818, %v1819
    %v1821 = vsel %vm163, %v1790, 0.0
    %v1822 = vadd.f32 %v1820, %v1821
    %v1823 = vsel %vm163, %v1792, 0.0
    %v1824 = vadd.f32 %v1822, %v1823
    %v1825 = vsel %vm163, %v1794, 0.0
    %v1826 = vadd.f32 %v1824, %v1825
    %v1827 = vsel %vm163, %v1796, 0.0
    %v1828 = vadd.f32 %v1826, %v1827
    %v1829 = vsel %vm163, %v1798, 0.0
    %v1830 = vadd.f32 %v1828, %v1829
    %v1831 = vsel %vm163, %v1800, 0.0
    %v1832 = vadd.f32 %v1830, %v1831
    %v1833 = vsel %vm163, %v1771, 0.0
    %v1834 = vsel %vm163, %v1773, 0.0
    %v1835 = vadd.f32 %v1833, %v1834
    %v1836 = vsel %vm163, %v1775, 0.0
    %v1837 = vadd.f32 %v1835, %v1836
    %v1838 = vsel %vm163, %v1777, 0.0
    %v1839 = vadd.f32 %v1837, %v1838
    %v1840 = vsel %vm163, %v1779, 0.0
    %v1841 = vadd.f32 %v1839, %v1840
    %v1842 = vsel %vm163, %v1781, 0.0
    %v1843 = vadd.f32 %v1841, %v1842
    %v1844 = vsel %vm163, %v1783, 0.0
    %v1845 = vadd.f32 %v1843, %v1844
    %v1846 = vsel %vm163, %v1785, 0.0
    %v1847 = vadd.f32 %v1845, %v1846
    %v1848 = vsel %vm163, %v1787, 0.0
    %v1849 = vadd.f32 %v1847, %v1848
    %v1850 = vsel %vm163, %v1789, 0.0
    %v1851 = vadd.f32 %v1849, %v1850
    %v1852 = vsel %vm163, %v1791, 0.0
    %v1853 = vadd.f32 %v1851, %v1852
    %v1854 = vsel %vm163, %v1793, 0.0
    %v1855 = vadd.f32 %v1853, %v1854
    %v1856 = vsel %vm163, %v1795, 0.0
    %v1857 = vadd.f32 %v1855, %v1856
    %v1858 = vsel %vm163, %v1797, 0.0
    %v1859 = vadd.f32 %v1857, %v1858
    %v1860 = vsel %vm163, %v1799, 0.0
    %v1861 = vadd.f32 %v1859, %v1860
    %v1862 = vsel %vm163, %v1801, 0.0
    %v1863 = vadd.f32 %v1861, %v1862
    %v1864 = vld [vmem:[%s5] sm:$0xff]
    %v1865 = vld [vmem:[%s5 + $0x8] sm:$0xff]
    %1867 = vset.pattern.permute.xlu0 0
    %1868 = vperm.xlu0 %1867, %v1864
    %v1869 = vpop.permute.xlu0 %1868
    %1872 = vset.pattern.permute.xlu0 0
    %1873 = vperm.xlu0 %1872, %v1865
    %v1874 = vpop.permute.xlu0 %1873
    %v1876 = vmul.f32 %v1832, %v1869
    %v1877 = vmul.f32 %v1863, %v1874
    %v1878 = vsel %vm163, %v1876, 0.0
    %v1879 = vsel %vm163, %v1877, 0.0
    %v1880 = vadd.f32 %v1878, %v1879
    %v1881 = vrot.slane %v1880, 4
    %v1882 = vadd.f32 %v1880, %v1881
    %v1883 = vrot.slane %v1882, 2
    %v1884 = vadd.f32 %v1882, %v1883
    %v1885 = vrot.slane %v1884, 1
    %v1886 = vadd.f32 %v1884, %v1885
    %s1887 = sld [smem:[#allocation2]]
    %v1888 = vstv %s1887
    %v1889 = vadd.f32 %v1886, %v1888
    %v1890 = vadd.f32 %v107, %v1889
    %v1891 = vadd.f32 %v108, %v1889
    %v1892 = vadd.f32 %v109, %v1889
    %v1893 = vadd.f32 %v110, %v1889
    %vm1894 = vcmask 24576
    %1895 = vst.msk [vmem:[#allocation8] sm:$0x1] %vm1894, %v1890
    %1896 = vst.msk [vmem:[#allocation8 + $0x1] sm:$0x1] %vm1894, %v1891
    %1897 = vst.msk [vmem:[#allocation8 + $0x2] sm:$0x1] %vm1894, %v1892
    %1898 = vst.msk [vmem:[#allocation8 + $0x3] sm:$0x1] %vm1894, %v1893
    // Predicated region
    $region46: #{tpu_custom_call.1} parent=1 // pred_check
      _
    $region47: #{tpu_custom_call.1} parent=1 // pred_check_branch
      %1900 = sbr.rel (0) target = $region49
    $region48: #{tpu_custom_call.1} parent=1 // pred_region
      %s1902 = ssub.s32 64, 64
      %1903 = vsyncadd [#allocation4], %s1902
      %s1904 = sshll.u32 [#allocation8], 4
      %s1905 = int_to_ptr.vmem [resolvable:$true] %s1904
      %1910 = dma.vmem_to_hbm [thread:$0]  %s1905, 64, %s9, [#allocation4], 16, 16, 1
    $region49: #{tpu_custom_call.1} parent=1 // pred_fallthru
      _
    // Predicated region
    $region50: #{tpu_custom_call.1} parent=1 // pred_check
      _
    $region51: #{tpu_custom_call.1} parent=1 // pred_check_branch
      %1912 = sbr.rel (0) target = $region53
    $region52: #{tpu_custom_call.1} parent=1 // pred_region
      %1913 = dma.done [#allocation4], 64
    $region53: #{tpu_custom_call.1} parent=1 // pred_fallthru
      _
    %1914 = vsyncpa [#allocation4], 1
    %1915 = vsyncpa [#allocation5], 1
    %1916 = vsyncpa [#allocation7], 1

</llo_original>
